<compile_context>
chip_gen: v5e
topology: v5e:2x2
jax: 0.10.0
libtpu: 0.0.40
codegen_flags: <defaults>
</compile_context>

<pallas_src>
import jax
import jax.numpy as jnp
from jax.experimental import pallas as pl
from jax.experimental.pallas import tpu as pltpu

# ------------------------- model config (small) -------------------------
VOCAB = 100
HIDDEN = 32
N_LAYERS = 2
N_HEADS = 2
HEAD_DIM = HIDDEN // N_HEADS
INTERMEDIATE = 64
MAX_POS = 16
BATCH = 2
SEQ = 8
LN_EPS = 1e-12
BN_EPS = 1e-5
FC1_DIM = 512
FC2_DIM = 256

LVEC_ROWS = 8      # packed vector rows per layer
LVEC_W = 128       # lane width of the layer vector slab
HVEC_W = 512       # lane width of the head vector slab

_VMEM = pl.BlockSpec(memory_space=pltpu.MemorySpace.VMEM)


# ------------------------- in-kernel helpers ----------------------------
def _mm(a, w):
    """bf16 operands on the MXU, f32 accumulation."""
    return jnp.dot(a.astype(jnp.bfloat16), w.astype(jnp.bfloat16),
                   preferred_element_type=jnp.float32)


def _ln(x, g, b):
    mu = jnp.mean(x, axis=-1, keepdims=True)
    var = jnp.mean(jnp.square(x - mu), axis=-1, keepdims=True)
    return (x - mu) * jax.lax.rsqrt(var + LN_EPS) * g + b


# ------------------------- the fused kernel ------------------------------
def _fused_forward_kernel(ids_ref, mask_ref, word_emb_ref, pos_type_ref,
                          layer_vecs_ref, head_vecs_ref,
                          qkv_ws_ref, o_ws_ref, w1s_ref, w2s_ref,
                          fc1_w_ref, fc2_w_ref, o_ref):
    B, S, H, nH, dH = BATCH, SEQ, HIDDEN, N_HEADS, HEAD_DIM

    # ---- unpack the two vector slabs (static slices, one load each) ----
    hv = head_vecs_ref[...]                       # [6, 512] f32
    fc1_b = hv[0:1, :]                            # [1, 512]  (BN1 folded in)
    fc2_b = hv[1:2, 0:FC2_DIM]                    # [1, 256]  (BN2 folded in)
    cls_w = hv[2:3, 0:FC2_DIM]                    # [1, 256]  (pre-transposed)
    cls_b = hv[3:4, 0:1]                          # [1, 1]
    emb_g = hv[4:5, 0:H]                          # [1, 32]
    emb_b = hv[5:6, 0:H]                          # [1, 32]
    lvs = layer_vecs_ref[...]                     # [N_LAYERS*8, 128] f32

    # ---- embedding: in-kernel one-hot gather (MXU) + LayerNorm ----
    ids = ids_ref[...]                                            # [B*S, 1] int32
    iota = jax.lax.broadcasted_iota(jnp.int32, (B * S, VOCAB), 1)
    onehot = jnp.where(ids == iota, 1.0, 0.0)                     # [B*S, VOCAB] f32
    emb = jnp.dot(onehot, word_emb_ref[...],
                  preferred_element_type=jnp.float32) + pos_type_ref[...]
    x = _ln(emb, emb_g, emb_b)                                    # [B*S, H] f32

    # additive attention mask, replicated over heads: [nH*B, S]
    add_mask = (1.0 - mask_ref[...].astype(jnp.float32)) * -1e9   # [B, S]
    add_mask = jnp.concatenate([add_mask] * nH, axis=0)           # [nH*B, S]

    for l in range(N_LAYERS):                     # unrolled at trace time
        lv = lvs[l * LVEC_ROWS:(l + 1) * LVEC_ROWS]
        qkv_b = lv[0:1, 0:3 * H]
        o_b = lv[1:2, 0:H]
        ln1_g = lv[2:3, 0:H]
        ln1_b = lv[3:4, 0:H]
        b1 = lv[4:5, 0:INTERMEDIATE]
        b2 = lv[5:6, 0:H]
        ln2_g = lv[6:7, 0:H]
        ln2_b = lv[7:8, 0:H]

        # fused QKV projection (1/sqrt(dH) pre-folded into q columns/bias)
        qkv = _mm(x, qkv_ws_ref[l]) + qkv_b                       # [B*S, 3H] f32
        qkv3 = qkv.reshape(B, S, 3 * H)

        # gather heads into the batch axis -> ONE batched dot per stage
        q = jnp.concatenate(
            [qkv3[:, :, h * dH:(h + 1) * dH] for h in range(nH)], axis=0)
        k = jnp.concatenate(
            [qkv3[:, :, H + h * dH:H + (h + 1) * dH] for h in range(nH)], axis=0)
        v = jnp.concatenate(
            [qkv3[:, :, 2 * H + h * dH:2 * H + (h + 1) * dH] for h in range(nH)], axis=0)
        # q, k, v: [nH*B, S, dH]

        s = jnp.einsum("bqd,bkd->bqk",
                       q.astype(jnp.bfloat16), k.astype(jnp.bfloat16),
                       preferred_element_type=jnp.float32)        # [nH*B, S, S]
        s = s + add_mask[:, None, :]
        s = s - jnp.max(s, axis=-1, keepdims=True)
        e = jnp.exp(s)                                            # EUP
        p = e * pl.reciprocal(jnp.sum(e, axis=-1, keepdims=True), approx=True)
        ctx = jnp.einsum("bqk,bkd->bqd",
                         p.astype(jnp.bfloat16), v.astype(jnp.bfloat16),
                         preferred_element_type=jnp.float32)      # [nH*B, S, dH]
        ctx = jnp.concatenate([ctx[h * B:(h + 1) * B] for h in range(nH)], axis=-1)
        ctx = ctx.reshape(B * S, H)

        attn_out = _mm(ctx, o_ws_ref[l]) + o_b
        x1 = _ln(x + attn_out, ln1_g, ln1_b)
        ffn = jax.nn.gelu(_mm(x1, w1s_ref[l]) + b1, approximate=True)
        ffn = _mm(ffn, w2s_ref[l]) + b2
        x = _ln(x1 + ffn, ln2_g, ln2_b)

    # ---- head: mean-pool + fc1(+BN1)+relu + fc2(+BN2)+relu + classifier ----
    # un-masked mean over sequence, matching torch.mean(hidden_states, dim=1)
    pooled = jnp.mean(x.reshape(B, S, H), axis=1)                 # [B, H]
    h1 = jnp.maximum(_mm(pooled, fc1_w_ref[...]) + fc1_b, 0.0)    # [B, 512]
    h2 = jnp.maximum(_mm(h1, fc2_w_ref[...]) + fc2_b, 0.0)        # [B, 256]
    # N=1 classifier: VPU broadcast-multiply + lane reduction (no MXU pass)
    logits = jnp.sum(h2 * cls_w, axis=-1, keepdims=True) + cls_b
    o_ref[...] = logits                                           # [B, 1]


# ------------------------- parameter construction -----------------------
def init_params(key):
    def norm(key, shape, scale=0.02):
        return scale * jax.random.normal(key, shape, dtype=jnp.float32)

    keys = iter(jax.random.split(key, 256))
    params = {
        "word_emb": norm(next(keys), (VOCAB, HIDDEN)),
        "pos_emb": norm(next(keys), (MAX_POS, HIDDEN)),
        "type_emb": norm(next(keys), (2, HIDDEN)),
        "emb_ln_g": jnp.ones((HIDDEN,), jnp.float32),
        "emb_ln_b": jnp.zeros((HIDDEN,), jnp.float32),
        "layers": [],
    }
    for _ in range(N_LAYERS):
        layer = {
            "q_w": norm(next(keys), (HIDDEN, HIDDEN)), "q_b": jnp.zeros((HIDDEN,), jnp.float32),
            "k_w": norm(next(keys), (HIDDEN, HIDDEN)), "k_b": jnp.zeros((HIDDEN,), jnp.float32),
            "v_w": norm(next(keys), (HIDDEN, HIDDEN)), "v_b": jnp.zeros((HIDDEN,), jnp.float32),
            "o_w": norm(next(keys), (HIDDEN, HIDDEN)), "o_b": jnp.zeros((HIDDEN,), jnp.float32),
            "ln1_g": jnp.ones((HIDDEN,), jnp.float32), "ln1_b": jnp.zeros((HIDDEN,), jnp.float32),
            "w1": norm(next(keys), (HIDDEN, INTERMEDIATE)), "b1": jnp.zeros((INTERMEDIATE,), jnp.float32),
            "w2": norm(next(keys), (INTERMEDIATE, HIDDEN)), "b2": jnp.zeros((HIDDEN,), jnp.float32),
            "ln2_g": jnp.ones((HIDDEN,), jnp.float32), "ln2_b": jnp.zeros((HIDDEN,), jnp.float32),
        }
        params["layers"].append(layer)
    params["head"] = {
        "fc1_w": norm(next(keys), (HIDDEN, FC1_DIM)), "fc1_b": jnp.zeros((FC1_DIM,), jnp.float32),
        "bn1_g": jnp.ones((FC1_DIM,), jnp.float32), "bn1_b": jnp.zeros((FC1_DIM,), jnp.float32),
        "bn1_rm": jnp.zeros((FC1_DIM,), jnp.float32), "bn1_rv": jnp.ones((FC1_DIM,), jnp.float32),
        "fc2_w": norm(next(keys), (FC1_DIM, FC2_DIM)), "fc2_b": jnp.zeros((FC2_DIM,), jnp.float32),
        "bn2_g": jnp.ones((FC2_DIM,), jnp.float32), "bn2_b": jnp.zeros((FC2_DIM,), jnp.float32),
        "bn2_rm": jnp.zeros((FC2_DIM,), jnp.float32), "bn2_rv": jnp.ones((FC2_DIM,), jnp.float32),
        "cls_w": norm(next(keys), (FC2_DIM, 1)), "cls_b": jnp.zeros((1,), jnp.float32),
    }
    return params


def prepare_params(params):
    """One-time packing: fold scales/BN, cast weights to bf16, pack vectors into slabs."""
    H = HIDDEN

    def pad_row(v, width):
        v = v.astype(jnp.float32)
        return jnp.pad(v, (0, width - v.shape[0]))

    scale = 1.0 / (HEAD_DIM ** 0.5)
    qkv_ws, o_ws, w1s, w2s, lvec_rows = [], [], [], [], []
    for layer in params["layers"]:
        # 1/sqrt(dH) folded into the q columns / q bias
        qkv_w = jnp.concatenate([layer["q_w"] * scale, layer["k_w"], layer["v_w"]], axis=1)
        qkv_b = jnp.concatenate([layer["q_b"] * scale, layer["k_b"], layer["v_b"]], axis=0)
        qkv_ws.append(qkv_w.astype(jnp.bfloat16))
        o_ws.append(layer["o_w"].astype(jnp.bfloat16))
        w1s.append(layer["w1"].astype(jnp.bfloat16))
        w2s.append(layer["w2"].astype(jnp.bfloat16))
        rows = [qkv_b, layer["o_b"], layer["ln1_g"], layer["ln1_b"],
                layer["b1"], layer["b2"], layer["ln2_g"], layer["ln2_b"]]
        lvec_rows += [pad_row(r, LVEC_W) for r in rows]

    hp = params["head"]
    # fold eval-mode BatchNorm (running stats) directly into the fc weights/biases
    a1 = hp["bn1_g"] / jnp.sqrt(hp["bn1_rv"] + BN_EPS)
    c1 = hp["bn1_b"] - hp["bn1_rm"] * a1
    a2 = hp["bn2_g"] / jnp.sqrt(hp["bn2_rv"] + BN_EPS)
    c2 = hp["bn2_b"] - hp["bn2_rm"] * a2
    fc1_w = (hp["fc1_w"] * a1[None, :]).astype(jnp.bfloat16)
    fc1_b = hp["fc1_b"] * a1 + c1
    fc2_w = (hp["fc2_w"] * a2[None, :]).astype(jnp.bfloat16)
    fc2_b = hp["fc2_b"] * a2 + c2

    head_rows = [fc1_b, fc2_b, hp["cls_w"][:, 0], hp["cls_b"],
                 params["emb_ln_g"], params["emb_ln_b"]]
    head_vecs = jnp.stack([pad_row(r, HVEC_W) for r in head_rows], axis=0)  # [6, 512]

    # position + token-type embeddings pre-summed and pre-broadcast to [B*S, H]
    pos_type = jnp.tile(params["pos_emb"][:SEQ] + params["type_emb"][0][None, :],
                        (BATCH, 1))

    return {
        "word_emb": params["word_emb"].astype(jnp.float32),        # [VOCAB, H]
        "pos_type": pos_type,                                       # [B*S, H]
        "layer_vecs": jnp.stack(lvec_rows, axis=0),                 # [L*8, 128]
        "head_vecs": head_vecs,                                     # [6, 512]
        "qkv_ws": jnp.stack(qkv_ws, axis=0),                        # [L, H, 3H] bf16
        "o_ws": jnp.stack(o_ws, axis=0),                            # [L, H, H]  bf16
        "w1s": jnp.stack(w1s, axis=0),                              # [L, H, I]  bf16
        "w2s": jnp.stack(w2s, axis=0),                              # [L, I, H]  bf16
        "fc1_w": fc1_w,                                             # [H, 512]   bf16
        "fc2_w": fc2_w,                                             # [512, 256] bf16
    }


# ------------------------- forward pass ----------------------------------
@jax.jit
def forward(prep, input_ids, attention_mask):
    B, S = input_ids.shape
    ids = input_ids.reshape(B * S, 1).astype(jnp.int32)
    mask = attention_mask.astype(jnp.int32)
    args = (ids, mask,
            prep["word_emb"], prep["pos_type"],
            prep["layer_vecs"], prep["head_vecs"],
            prep["qkv_ws"], prep["o_ws"], prep["w1s"], prep["w2s"],
            prep["fc1_w"], prep["fc2_w"])
    # single fused kernel launch: everything stays in VMEM; only logits leave.
    return pl.pallas_call(
        _fused_forward_kernel,
        out_shape=jax.ShapeDtypeStruct((B, 1), jnp.float32),
        in_specs=[_VMEM] * len(args),
        out_specs=_VMEM,
    )(*args)


# ------------------------- main ------------------------------------------
if __name__ == "__main__":
    params = init_params(jax.random.PRNGKey(42))
    prep = prepare_params(params)          # one-time packing, not in the per-call path

    key = jax.random.PRNGKey(0)
    input_ids = jax.random.randint(key, (BATCH, SEQ), 0, VOCAB, dtype=jnp.int32)
    attention_mask = jnp.ones((BATCH, SEQ), dtype=jnp.int32).at[1, 6:].set(0)

    logits = forward(prep, input_ids, attention_mask)
    logits = jax.block_until_ready(logits)

    assert logits.shape == (BATCH, 1) and logits.dtype == jnp.float32
    assert bool(jnp.all(jnp.isfinite(logits)))
    print("KERNEL_OK")
</pallas_src>

<mosaic_0001>
module attributes {stable_mosaic.version = 11 : i64} {
  func.func @_fused_forward_kernel(%arg0: memref<16x1xi32, #tpu.memory_space<vmem>>, %arg1: memref<2x8xi32, #tpu.memory_space<vmem>>, %arg2: memref<100x32xf32, #tpu.memory_space<vmem>>, %arg3: memref<16x32xf32, #tpu.memory_space<vmem>>, %arg4: memref<16x128xf32, #tpu.memory_space<vmem>>, %arg5: memref<6x512xf32, #tpu.memory_space<vmem>>, %arg6: memref<2x32x96xbf16, #tpu.memory_space<vmem>>, %arg7: memref<2x32x32xbf16, #tpu.memory_space<vmem>>, %arg8: memref<2x32x64xbf16, #tpu.memory_space<vmem>>, %arg9: memref<2x64x32xbf16, #tpu.memory_space<vmem>>, %arg10: memref<32x512xbf16, #tpu.memory_space<vmem>>, %arg11: memref<512x256xbf16, #tpu.memory_space<vmem>>, %arg12: memref<2x1xf32, #tpu.memory_space<vmem>>) attributes {dimension_semantics = [], scalar_prefetch = 0 : i64, scratch_operands = 0 : i64, tpu.core_type = #tpu.core_type<tc>} {
    %c0 = arith.constant 0 : index
    %c0_0 = arith.constant 0 : index
    %0 = vector.load %arg5[%c0, %c0_0] : memref<6x512xf32, #tpu.memory_space<vmem>>, vector<6x512xf32>
    %1 = vector.extract_strided_slice %0 {offsets = [0, 0], sizes = [1, 512], strides = [1, 1]} : vector<6x512xf32> to vector<1x512xf32>
    %2 = vector.extract_strided_slice %0 {offsets = [1, 0], sizes = [1, 256], strides = [1, 1]} : vector<6x512xf32> to vector<1x256xf32>
    %3 = vector.extract_strided_slice %0 {offsets = [2, 0], sizes = [1, 256], strides = [1, 1]} : vector<6x512xf32> to vector<1x256xf32>
    %4 = vector.extract_strided_slice %0 {offsets = [3, 0], sizes = [1, 1], strides = [1, 1]} : vector<6x512xf32> to vector<1x1xf32>
    %5 = vector.extract_strided_slice %0 {offsets = [4, 0], sizes = [1, 32], strides = [1, 1]} : vector<6x512xf32> to vector<1x32xf32>
    %6 = vector.extract_strided_slice %0 {offsets = [5, 0], sizes = [1, 32], strides = [1, 1]} : vector<6x512xf32> to vector<1x32xf32>
    %c0_1 = arith.constant 0 : index
    %c0_2 = arith.constant 0 : index
    %7 = vector.load %arg4[%c0_1, %c0_2] : memref<16x128xf32, #tpu.memory_space<vmem>>, vector<16x128xf32>
    %c0_3 = arith.constant 0 : index
    %c0_4 = arith.constant 0 : index
    %8 = vector.load %arg0[%c0_3, %c0_4] : memref<16x1xi32, #tpu.memory_space<vmem>>, vector<16x1xi32>
    %9 = tpu.iota {dimensions = array<i32: 1>} : vector<16x100xi32>
    %10 = vector.broadcast %8 : vector<16x1xi32> to vector<16x100xi32>
    %11 = arith.cmpi eq, %10, %9 : vector<16x100xi32>
    %cst = arith.constant 1.000000e+00 : f32
    %cst_5 = arith.constant 0.000000e+00 : f32
    %12 = vector.broadcast %cst : f32 to vector<16x100xf32>
    %13 = vector.broadcast %cst_5 : f32 to vector<16x100xf32>
    %14 = arith.select %11, %12, %13 : vector<16x100xi1>, vector<16x100xf32>
    %c0_6 = arith.constant 0 : index
    %c0_7 = arith.constant 0 : index
    %15 = vector.load %arg2[%c0_6, %c0_7] : memref<100x32xf32, #tpu.memory_space<vmem>>, vector<100x32xf32>
    %cst_8 = arith.constant dense<0.000000e+00> : vector<16x32xf32>
    %16 = tpu.matmul %14, %15, %cst_8 {dimension_numbers = #tpu.dot_dimension_numbers<[1], [0], [0], [1], [0, 0, 1, 1], [], []>} : vector<16x100xf32>, vector<100x32xf32>, vector<16x32xf32> -> vector<16x32xf32>
    %c0_9 = arith.constant 0 : index
    %c0_10 = arith.constant 0 : index
    %17 = vector.load %arg3[%c0_9, %c0_10] : memref<16x32xf32, #tpu.memory_space<vmem>>, vector<16x32xf32>
    %18 = arith.addf %16, %17 : vector<16x32xf32>
    %cst_11 = arith.constant dense<0.000000e+00> : vector<16xf32>
    %19 = vector.multi_reduction <add>, %18, %cst_11 [1] : vector<16x32xf32> to vector<16xf32>
    %20 = vector.shape_cast %19 : vector<16xf32> to vector<16x1xf32>
    %cst_12 = arith.constant 3.200000e+01 : f32
    %21 = vector.broadcast %cst_12 : f32 to vector<16x1xf32>
    %22 = arith.divf %20, %21 : vector<16x1xf32>
    %23 = vector.broadcast %22 : vector<16x1xf32> to vector<16x32xf32>
    %24 = arith.subf %18, %23 : vector<16x32xf32>
    %25 = arith.mulf %24, %24 : vector<16x32xf32>
    %cst_13 = arith.constant dense<0.000000e+00> : vector<16xf32>
    %26 = vector.multi_reduction <add>, %25, %cst_13 [1] : vector<16x32xf32> to vector<16xf32>
    %27 = vector.shape_cast %26 : vector<16xf32> to vector<16x1xf32>
    %cst_14 = arith.constant 3.200000e+01 : f32
    %28 = vector.broadcast %cst_14 : f32 to vector<16x1xf32>
    %29 = arith.divf %27, %28 : vector<16x1xf32>
    %30 = vector.broadcast %22 : vector<16x1xf32> to vector<16x32xf32>
    %31 = arith.subf %18, %30 : vector<16x32xf32>
    %cst_15 = arith.constant 9.99999996E-13 : f32
    %32 = vector.broadcast %cst_15 : f32 to vector<16x1xf32>
    %33 = arith.addf %29, %32 : vector<16x1xf32>
    %34 = math.rsqrt %33 : vector<16x1xf32>
    %35 = vector.broadcast %34 : vector<16x1xf32> to vector<16x32xf32>
    %36 = arith.mulf %31, %35 : vector<16x32xf32>
    %37 = vector.broadcast %5 : vector<1x32xf32> to vector<16x32xf32>
    %38 = arith.mulf %36, %37 : vector<16x32xf32>
    %39 = vector.broadcast %6 : vector<1x32xf32> to vector<16x32xf32>
    %40 = arith.addf %38, %39 : vector<16x32xf32>
    %c0_16 = arith.constant 0 : index
    %c0_17 = arith.constant 0 : index
    %41 = vector.load %arg1[%c0_16, %c0_17] : memref<2x8xi32, #tpu.memory_space<vmem>>, vector<2x8xi32>
    %42 = arith.sitofp %41 : vector<2x8xi32> to vector<2x8xf32>
    %cst_18 = arith.constant 1.000000e+00 : f32
    %43 = vector.broadcast %cst_18 : f32 to vector<2x8xf32>
    %44 = arith.subf %43, %42 : vector<2x8xf32>
    %cst_19 = arith.constant -1.000000e+09 : f32
    %45 = vector.broadcast %cst_19 : f32 to vector<2x8xf32>
    %46 = arith.mulf %44, %45 : vector<2x8xf32>
    %47 = tpu.concatenate %46, %46 in 0 : vector<2x8xf32>, vector<2x8xf32> -> vector<4x8xf32>
    %48 = vector.extract_strided_slice %7 {offsets = [0, 0], sizes = [8, 128], strides = [1, 1]} : vector<16x128xf32> to vector<8x128xf32>
    %49 = vector.extract_strided_slice %48 {offsets = [0, 0], sizes = [1, 96], strides = [1, 1]} : vector<8x128xf32> to vector<1x96xf32>
    %50 = vector.extract_strided_slice %48 {offsets = [1, 0], sizes = [1, 32], strides = [1, 1]} : vector<8x128xf32> to vector<1x32xf32>
    %51 = vector.extract_strided_slice %48 {offsets = [2, 0], sizes = [1, 32], strides = [1, 1]} : vector<8x128xf32> to vector<1x32xf32>
    %52 = vector.extract_strided_slice %48 {offsets = [3, 0], sizes = [1, 32], strides = [1, 1]} : vector<8x128xf32> to vector<1x32xf32>
    %53 = vector.extract_strided_slice %48 {offsets = [4, 0], sizes = [1, 64], strides = [1, 1]} : vector<8x128xf32> to vector<1x64xf32>
    %54 = vector.extract_strided_slice %48 {offsets = [5, 0], sizes = [1, 32], strides = [1, 1]} : vector<8x128xf32> to vector<1x32xf32>
    %55 = vector.extract_strided_slice %48 {offsets = [6, 0], sizes = [1, 32], strides = [1, 1]} : vector<8x128xf32> to vector<1x32xf32>
    %56 = vector.extract_strided_slice %48 {offsets = [7, 0], sizes = [1, 32], strides = [1, 1]} : vector<8x128xf32> to vector<1x32xf32>
    %c0_20 = arith.constant 0 : index
    %c0_21 = arith.constant 0 : index
    %c0_22 = arith.constant 0 : index
    %57 = vector.load %arg6[%c0_20, %c0_21, %c0_22] : memref<2x32x96xbf16, #tpu.memory_space<vmem>>, vector<1x32x96xbf16>
    %58 = vector.shape_cast %57 : vector<1x32x96xbf16> to vector<32x96xbf16>
    %59 = arith.truncf %40 : vector<16x32xf32> to vector<16x32xbf16>
    %cst_23 = arith.constant dense<0.000000e+00> : vector<16x96xf32>
    %60 = tpu.matmul %59, %58, %cst_23 {dimension_numbers = #tpu.dot_dimension_numbers<[1], [0], [0], [1], [0, 0, 1, 1], [], []>} : vector<16x32xbf16>, vector<32x96xbf16>, vector<16x96xf32> -> vector<16x96xf32>
    %61 = vector.broadcast %49 : vector<1x96xf32> to vector<16x96xf32>
    %62 = arith.addf %60, %61 : vector<16x96xf32>
    %63 = vector.shape_cast %62 : vector<16x96xf32> to vector<2x8x96xf32>
    %64 = vector.extract_strided_slice %63 {offsets = [0, 0, 0], sizes = [2, 8, 16], strides = [1, 1, 1]} : vector<2x8x96xf32> to vector<2x8x16xf32>
    %65 = vector.extract_strided_slice %63 {offsets = [0, 0, 16], sizes = [2, 8, 16], strides = [1, 1, 1]} : vector<2x8x96xf32> to vector<2x8x16xf32>
    %66 = tpu.concatenate %64, %65 in 0 : vector<2x8x16xf32>, vector<2x8x16xf32> -> vector<4x8x16xf32>
    %67 = vector.extract_strided_slice %63 {offsets = [0, 0, 32], sizes = [2, 8, 16], strides = [1, 1, 1]} : vector<2x8x96xf32> to vector<2x8x16xf32>
    %68 = vector.extract_strided_slice %63 {offsets = [0, 0, 48], sizes = [2, 8, 16], strides = [1, 1, 1]} : vector<2x8x96xf32> to vector<2x8x16xf32>
    %69 = tpu.concatenate %67, %68 in 0 : vector<2x8x16xf32>, vector<2x8x16xf32> -> vector<4x8x16xf32>
    %70 = vector.extract_strided_slice %63 {offsets = [0, 0, 64], sizes = [2, 8, 16], strides = [1, 1, 1]} : vector<2x8x96xf32> to vector<2x8x16xf32>
    %71 = vector.extract_strided_slice %63 {offsets = [0, 0, 80], sizes = [2, 8, 16], strides = [1, 1, 1]} : vector<2x8x96xf32> to vector<2x8x16xf32>
    %72 = tpu.concatenate %70, %71 in 0 : vector<2x8x16xf32>, vector<2x8x16xf32> -> vector<4x8x16xf32>
    %73 = arith.truncf %66 : vector<4x8x16xf32> to vector<4x8x16xbf16>
    %74 = arith.truncf %69 : vector<4x8x16xf32> to vector<4x8x16xbf16>
    "tpu.trace_start"() <{level = 10 : i32, message = "bqd,bkd->bqk"}> : () -> ()
    %cst_24 = arith.constant dense<0.000000e+00> : vector<4x8x8xf32>
    %75 = tpu.matmul %73, %74, %cst_24 {dimension_numbers = #tpu.dot_dimension_numbers<[2], [2], [1], [1], [0, 0, 0, 1, 1, 1], [0], [0]>} : vector<4x8x16xbf16>, vector<4x8x16xbf16>, vector<4x8x8xf32> -> vector<4x8x8xf32>
    "tpu.trace_stop"() : () -> ()
    %76 = vector.shape_cast %47 : vector<4x8xf32> to vector<4x1x8xf32>
    %77 = vector.broadcast %76 : vector<4x1x8xf32> to vector<4x8x8xf32>
    %78 = arith.addf %75, %77 : vector<4x8x8xf32>
    %cst_25 = arith.constant dense<0xFF800000> : vector<4x8xf32>
    %79 = vector.multi_reduction <maximumf>, %78, %cst_25 [2] : vector<4x8x8xf32> to vector<4x8xf32>
    %80 = vector.shape_cast %79 : vector<4x8xf32> to vector<4x8x1xf32>
    %81 = vector.broadcast %80 : vector<4x8x1xf32> to vector<4x8x8xf32>
    %82 = arith.subf %78, %81 : vector<4x8x8xf32>
    %83 = math.exp %82 : vector<4x8x8xf32>
    %cst_26 = arith.constant dense<0.000000e+00> : vector<4x8xf32>
    %84 = vector.multi_reduction <add>, %83, %cst_26 [2] : vector<4x8x8xf32> to vector<4x8xf32>
    %85 = vector.shape_cast %84 : vector<4x8xf32> to vector<4x8x1xf32>
    %86 = tpu.reciprocal %85 {approx = true} : vector<4x8x1xf32> -> vector<4x8x1xf32>
    %87 = vector.broadcast %86 : vector<4x8x1xf32> to vector<4x8x8xf32>
    %88 = arith.mulf %83, %87 : vector<4x8x8xf32>
    %89 = arith.truncf %88 : vector<4x8x8xf32> to vector<4x8x8xbf16>
    %90 = arith.truncf %72 : vector<4x8x16xf32> to vector<4x8x16xbf16>
    "tpu.trace_start"() <{level = 10 : i32, message = "bqk,bkd->bqd"}> : () -> ()
    %cst_27 = arith.constant dense<0.000000e+00> : vector<4x8x16xf32>
    %91 = tpu.matmul %89, %90, %cst_27 {dimension_numbers = #tpu.dot_dimension_numbers<[2], [1], [1], [2], [0, 0, 0, 1, 1, 2], [0], [0]>} : vector<4x8x8xbf16>, vector<4x8x16xbf16>, vector<4x8x16xf32> -> vector<4x8x16xf32>
    "tpu.trace_stop"() : () -> ()
    %92 = vector.extract_strided_slice %91 {offsets = [0, 0, 0], sizes = [2, 8, 16], strides = [1, 1, 1]} : vector<4x8x16xf32> to vector<2x8x16xf32>
    %93 = vector.extract_strided_slice %91 {offsets = [2, 0, 0], sizes = [2, 8, 16], strides = [1, 1, 1]} : vector<4x8x16xf32> to vector<2x8x16xf32>
    %94 = tpu.concatenate %92, %93 in 2 : vector<2x8x16xf32>, vector<2x8x16xf32> -> vector<2x8x32xf32>
    %95 = vector.shape_cast %94 : vector<2x8x32xf32> to vector<16x32xf32>
    %c0_28 = arith.constant 0 : index
    %c0_29 = arith.constant 0 : index
    %c0_30 = arith.constant 0 : index
    %96 = vector.load %arg7[%c0_28, %c0_29, %c0_30] : memref<2x32x32xbf16, #tpu.memory_space<vmem>>, vector<1x32x32xbf16>
    %97 = vector.shape_cast %96 : vector<1x32x32xbf16> to vector<32x32xbf16>
    %98 = arith.truncf %95 : vector<16x32xf32> to vector<16x32xbf16>
    %cst_31 = arith.constant dense<0.000000e+00> : vector<16x32xf32>
    %99 = tpu.matmul %98, %97, %cst_31 {dimension_numbers = #tpu.dot_dimension_numbers<[1], [0], [0], [1], [0, 0, 1, 1], [], []>} : vector<16x32xbf16>, vector<32x32xbf16>, vector<16x32xf32> -> vector<16x32xf32>
    %100 = vector.broadcast %50 : vector<1x32xf32> to vector<16x32xf32>
    %101 = arith.addf %99, %100 : vector<16x32xf32>
    %102 = arith.addf %40, %101 : vector<16x32xf32>
    %cst_32 = arith.constant dense<0.000000e+00> : vector<16xf32>
    %103 = vector.multi_reduction <add>, %102, %cst_32 [1] : vector<16x32xf32> to vector<16xf32>
    %104 = vector.shape_cast %103 : vector<16xf32> to vector<16x1xf32>
    %cst_33 = arith.constant 3.200000e+01 : f32
    %105 = vector.broadcast %cst_33 : f32 to vector<16x1xf32>
    %106 = arith.divf %104, %105 : vector<16x1xf32>
    %107 = vector.broadcast %106 : vector<16x1xf32> to vector<16x32xf32>
    %108 = arith.subf %102, %107 : vector<16x32xf32>
    %109 = arith.mulf %108, %108 : vector<16x32xf32>
    %cst_34 = arith.constant dense<0.000000e+00> : vector<16xf32>
    %110 = vector.multi_reduction <add>, %109, %cst_34 [1] : vector<16x32xf32> to vector<16xf32>
    %111 = vector.shape_cast %110 : vector<16xf32> to vector<16x1xf32>
    %cst_35 = arith.constant 3.200000e+01 : f32
    %112 = vector.broadcast %cst_35 : f32 to vector<16x1xf32>
    %113 = arith.divf %111, %112 : vector<16x1xf32>
    %114 = vector.broadcast %106 : vector<16x1xf32> to vector<16x32xf32>
    %115 = arith.subf %102, %114 : vector<16x32xf32>
    %cst_36 = arith.constant 9.99999996E-13 : f32
    %116 = vector.broadcast %cst_36 : f32 to vector<16x1xf32>
    %117 = arith.addf %113, %116 : vector<16x1xf32>
    %118 = math.rsqrt %117 : vector<16x1xf32>
    %119 = vector.broadcast %118 : vector<16x1xf32> to vector<16x32xf32>
    %120 = arith.mulf %115, %119 : vector<16x32xf32>
    %121 = vector.broadcast %51 : vector<1x32xf32> to vector<16x32xf32>
    %122 = arith.mulf %120, %121 : vector<16x32xf32>
    %123 = vector.broadcast %52 : vector<1x32xf32> to vector<16x32xf32>
    %124 = arith.addf %122, %123 : vector<16x32xf32>
    %c0_37 = arith.constant 0 : index
    %c0_38 = arith.constant 0 : index
    %c0_39 = arith.constant 0 : index
    %125 = vector.load %arg8[%c0_37, %c0_38, %c0_39] : memref<2x32x64xbf16, #tpu.memory_space<vmem>>, vector<1x32x64xbf16>
    %126 = vector.shape_cast %125 : vector<1x32x64xbf16> to vector<32x64xbf16>
    %127 = arith.truncf %124 : vector<16x32xf32> to vector<16x32xbf16>
    %cst_40 = arith.constant dense<0.000000e+00> : vector<16x64xf32>
    %128 = tpu.matmul %127, %126, %cst_40 {dimension_numbers = #tpu.dot_dimension_numbers<[1], [0], [0], [1], [0, 0, 1, 1], [], []>} : vector<16x32xbf16>, vector<32x64xbf16>, vector<16x64xf32> -> vector<16x64xf32>
    %129 = vector.broadcast %53 : vector<1x64xf32> to vector<16x64xf32>
    %130 = arith.addf %128, %129 : vector<16x64xf32>
    %131 = arith.mulf %130, %130 : vector<16x64xf32>
    %132 = arith.mulf %130, %131 : vector<16x64xf32>
    %cst_41 = arith.constant 4.471500e-02 : f32
    %133 = vector.broadcast %cst_41 : f32 to vector<16x64xf32>
    %134 = arith.mulf %133, %132 : vector<16x64xf32>
    %135 = arith.addf %130, %134 : vector<16x64xf32>
    %cst_42 = arith.constant 0.797884583 : f32
    %136 = vector.broadcast %cst_42 : f32 to vector<16x64xf32>
    %137 = arith.mulf %136, %135 : vector<16x64xf32>
    %138 = math.tanh %137 : vector<16x64xf32>
    %cst_43 = arith.constant 1.000000e+00 : f32
    %139 = vector.broadcast %cst_43 : f32 to vector<16x64xf32>
    %140 = arith.addf %139, %138 : vector<16x64xf32>
    %cst_44 = arith.constant 5.000000e-01 : f32
    %141 = vector.broadcast %cst_44 : f32 to vector<16x64xf32>
    %142 = arith.mulf %141, %140 : vector<16x64xf32>
    %143 = arith.mulf %130, %142 : vector<16x64xf32>
    %c0_45 = arith.constant 0 : index
    %c0_46 = arith.constant 0 : index
    %c0_47 = arith.constant 0 : index
    %144 = vector.load %arg9[%c0_45, %c0_46, %c0_47] : memref<2x64x32xbf16, #tpu.memory_space<vmem>>, vector<1x64x32xbf16>
    %145 = vector.shape_cast %144 : vector<1x64x32xbf16> to vector<64x32xbf16>
    %146 = arith.truncf %143 : vector<16x64xf32> to vector<16x64xbf16>
    %cst_48 = arith.constant dense<0.000000e+00> : vector<16x32xf32>
    %147 = tpu.matmul %146, %145, %cst_48 {dimension_numbers = #tpu.dot_dimension_numbers<[1], [0], [0], [1], [0, 0, 1, 1], [], []>} : vector<16x64xbf16>, vector<64x32xbf16>, vector<16x32xf32> -> vector<16x32xf32>
    %148 = vector.broadcast %54 : vector<1x32xf32> to vector<16x32xf32>
    %149 = arith.addf %147, %148 : vector<16x32xf32>
    %150 = arith.addf %124, %149 : vector<16x32xf32>
    %cst_49 = arith.constant dense<0.000000e+00> : vector<16xf32>
    %151 = vector.multi_reduction <add>, %150, %cst_49 [1] : vector<16x32xf32> to vector<16xf32>
    %152 = vector.shape_cast %151 : vector<16xf32> to vector<16x1xf32>
    %cst_50 = arith.constant 3.200000e+01 : f32
    %153 = vector.broadcast %cst_50 : f32 to vector<16x1xf32>
    %154 = arith.divf %152, %153 : vector<16x1xf32>
    %155 = vector.broadcast %154 : vector<16x1xf32> to vector<16x32xf32>
    %156 = arith.subf %150, %155 : vector<16x32xf32>
    %157 = arith.mulf %156, %156 : vector<16x32xf32>
    %cst_51 = arith.constant dense<0.000000e+00> : vector<16xf32>
    %158 = vector.multi_reduction <add>, %157, %cst_51 [1] : vector<16x32xf32> to vector<16xf32>
    %159 = vector.shape_cast %158 : vector<16xf32> to vector<16x1xf32>
    %cst_52 = arith.constant 3.200000e+01 : f32
    %160 = vector.broadcast %cst_52 : f32 to vector<16x1xf32>
    %161 = arith.divf %159, %160 : vector<16x1xf32>
    %162 = vector.broadcast %154 : vector<16x1xf32> to vector<16x32xf32>
    %163 = arith.subf %150, %162 : vector<16x32xf32>
    %cst_53 = arith.constant 9.99999996E-13 : f32
    %164 = vector.broadcast %cst_53 : f32 to vector<16x1xf32>
    %165 = arith.addf %161, %164 : vector<16x1xf32>
    %166 = math.rsqrt %165 : vector<16x1xf32>
    %167 = vector.broadcast %166 : vector<16x1xf32> to vector<16x32xf32>
    %168 = arith.mulf %163, %167 : vector<16x32xf32>
    %169 = vector.broadcast %55 : vector<1x32xf32> to vector<16x32xf32>
    %170 = arith.mulf %168, %169 : vector<16x32xf32>
    %171 = vector.broadcast %56 : vector<1x32xf32> to vector<16x32xf32>
    %172 = arith.addf %170, %171 : vector<16x32xf32>
    %173 = vector.extract_strided_slice %7 {offsets = [8, 0], sizes = [8, 128], strides = [1, 1]} : vector<16x128xf32> to vector<8x128xf32>
    %174 = vector.extract_strided_slice %173 {offsets = [0, 0], sizes = [1, 96], strides = [1, 1]} : vector<8x128xf32> to vector<1x96xf32>
    %175 = vector.extract_strided_slice %173 {offsets = [1, 0], sizes = [1, 32], strides = [1, 1]} : vector<8x128xf32> to vector<1x32xf32>
    %176 = vector.extract_strided_slice %173 {offsets = [2, 0], sizes = [1, 32], strides = [1, 1]} : vector<8x128xf32> to vector<1x32xf32>
    %177 = vector.extract_strided_slice %173 {offsets = [3, 0], sizes = [1, 32], strides = [1, 1]} : vector<8x128xf32> to vector<1x32xf32>
    %178 = vector.extract_strided_slice %173 {offsets = [4, 0], sizes = [1, 64], strides = [1, 1]} : vector<8x128xf32> to vector<1x64xf32>
    %179 = vector.extract_strided_slice %173 {offsets = [5, 0], sizes = [1, 32], strides = [1, 1]} : vector<8x128xf32> to vector<1x32xf32>
    %180 = vector.extract_strided_slice %173 {offsets = [6, 0], sizes = [1, 32], strides = [1, 1]} : vector<8x128xf32> to vector<1x32xf32>
    %181 = vector.extract_strided_slice %173 {offsets = [7, 0], sizes = [1, 32], strides = [1, 1]} : vector<8x128xf32> to vector<1x32xf32>
    %c1 = arith.constant 1 : index
    %c0_54 = arith.constant 0 : index
    %c0_55 = arith.constant 0 : index
    %182 = vector.load %arg6[%c1, %c0_54, %c0_55] : memref<2x32x96xbf16, #tpu.memory_space<vmem>>, vector<1x32x96xbf16>
    %183 = vector.shape_cast %182 : vector<1x32x96xbf16> to vector<32x96xbf16>
    %184 = arith.truncf %172 : vector<16x32xf32> to vector<16x32xbf16>
    %cst_56 = arith.constant dense<0.000000e+00> : vector<16x96xf32>
    %185 = tpu.matmul %184, %183, %cst_56 {dimension_numbers = #tpu.dot_dimension_numbers<[1], [0], [0], [1], [0, 0, 1, 1], [], []>} : vector<16x32xbf16>, vector<32x96xbf16>, vector<16x96xf32> -> vector<16x96xf32>
    %186 = vector.broadcast %174 : vector<1x96xf32> to vector<16x96xf32>
    %187 = arith.addf %185, %186 : vector<16x96xf32>
    %188 = vector.shape_cast %187 : vector<16x96xf32> to vector<2x8x96xf32>
    %189 = vector.extract_strided_slice %188 {offsets = [0, 0, 0], sizes = [2, 8, 16], strides = [1, 1, 1]} : vector<2x8x96xf32> to vector<2x8x16xf32>
    %190 = vector.extract_strided_slice %188 {offsets = [0, 0, 16], sizes = [2, 8, 16], strides = [1, 1, 1]} : vector<2x8x96xf32> to vector<2x8x16xf32>
    %191 = tpu.concatenate %189, %190 in 0 : vector<2x8x16xf32>, vector<2x8x16xf32> -> vector<4x8x16xf32>
    %192 = vector.extract_strided_slice %188 {offsets = [0, 0, 32], sizes = [2, 8, 16], strides = [1, 1, 1]} : vector<2x8x96xf32> to vector<2x8x16xf32>
    %193 = vector.extract_strided_slice %188 {offsets = [0, 0, 48], sizes = [2, 8, 16], strides = [1, 1, 1]} : vector<2x8x96xf32> to vector<2x8x16xf32>
    %194 = tpu.concatenate %192, %193 in 0 : vector<2x8x16xf32>, vector<2x8x16xf32> -> vector<4x8x16xf32>
    %195 = vector.extract_strided_slice %188 {offsets = [0, 0, 64], sizes = [2, 8, 16], strides = [1, 1, 1]} : vector<2x8x96xf32> to vector<2x8x16xf32>
    %196 = vector.extract_strided_slice %188 {offsets = [0, 0, 80], sizes = [2, 8, 16], strides = [1, 1, 1]} : vector<2x8x96xf32> to vector<2x8x16xf32>
    %197 = tpu.concatenate %195, %196 in 0 : vector<2x8x16xf32>, vector<2x8x16xf32> -> vector<4x8x16xf32>
    %198 = arith.truncf %191 : vector<4x8x16xf32> to vector<4x8x16xbf16>
    %199 = arith.truncf %194 : vector<4x8x16xf32> to vector<4x8x16xbf16>
    "tpu.trace_start"() <{level = 10 : i32, message = "bqd,bkd->bqk"}> : () -> ()
    %cst_57 = arith.constant dense<0.000000e+00> : vector<4x8x8xf32>
    %200 = tpu.matmul %198, %199, %cst_57 {dimension_numbers = #tpu.dot_dimension_numbers<[2], [2], [1], [1], [0, 0, 0, 1, 1, 1], [0], [0]>} : vector<4x8x16xbf16>, vector<4x8x16xbf16>, vector<4x8x8xf32> -> vector<4x8x8xf32>
    "tpu.trace_stop"() : () -> ()
    %201 = vector.shape_cast %47 : vector<4x8xf32> to vector<4x1x8xf32>
    %202 = vector.broadcast %201 : vector<4x1x8xf32> to vector<4x8x8xf32>
    %203 = arith.addf %200, %202 : vector<4x8x8xf32>
    %cst_58 = arith.constant dense<0xFF800000> : vector<4x8xf32>
    %204 = vector.multi_reduction <maximumf>, %203, %cst_58 [2] : vector<4x8x8xf32> to vector<4x8xf32>
    %205 = vector.shape_cast %204 : vector<4x8xf32> to vector<4x8x1xf32>
    %206 = vector.broadcast %205 : vector<4x8x1xf32> to vector<4x8x8xf32>
    %207 = arith.subf %203, %206 : vector<4x8x8xf32>
    %208 = math.exp %207 : vector<4x8x8xf32>
    %cst_59 = arith.constant dense<0.000000e+00> : vector<4x8xf32>
    %209 = vector.multi_reduction <add>, %208, %cst_59 [2] : vector<4x8x8xf32> to vector<4x8xf32>
    %210 = vector.shape_cast %209 : vector<4x8xf32> to vector<4x8x1xf32>
    %211 = tpu.reciprocal %210 {approx = true} : vector<4x8x1xf32> -> vector<4x8x1xf32>
    %212 = vector.broadcast %211 : vector<4x8x1xf32> to vector<4x8x8xf32>
    %213 = arith.mulf %208, %212 : vector<4x8x8xf32>
    %214 = arith.truncf %213 : vector<4x8x8xf32> to vector<4x8x8xbf16>
    %215 = arith.truncf %197 : vector<4x8x16xf32> to vector<4x8x16xbf16>
    "tpu.trace_start"() <{level = 10 : i32, message = "bqk,bkd->bqd"}> : () -> ()
    %cst_60 = arith.constant dense<0.000000e+00> : vector<4x8x16xf32>
    %216 = tpu.matmul %214, %215, %cst_60 {dimension_numbers = #tpu.dot_dimension_numbers<[2], [1], [1], [2], [0, 0, 0, 1, 1, 2], [0], [0]>} : vector<4x8x8xbf16>, vector<4x8x16xbf16>, vector<4x8x16xf32> -> vector<4x8x16xf32>
    "tpu.trace_stop"() : () -> ()
    %217 = vector.extract_strided_slice %216 {offsets = [0, 0, 0], sizes = [2, 8, 16], strides = [1, 1, 1]} : vector<4x8x16xf32> to vector<2x8x16xf32>
    %218 = vector.extract_strided_slice %216 {offsets = [2, 0, 0], sizes = [2, 8, 16], strides = [1, 1, 1]} : vector<4x8x16xf32> to vector<2x8x16xf32>
    %219 = tpu.concatenate %217, %218 in 2 : vector<2x8x16xf32>, vector<2x8x16xf32> -> vector<2x8x32xf32>
    %220 = vector.shape_cast %219 : vector<2x8x32xf32> to vector<16x32xf32>
    %c1_61 = arith.constant 1 : index
    %c0_62 = arith.constant 0 : index
    %c0_63 = arith.constant 0 : index
    %221 = vector.load %arg7[%c1_61, %c0_62, %c0_63] : memref<2x32x32xbf16, #tpu.memory_space<vmem>>, vector<1x32x32xbf16>
    %222 = vector.shape_cast %221 : vector<1x32x32xbf16> to vector<32x32xbf16>
    %223 = arith.truncf %220 : vector<16x32xf32> to vector<16x32xbf16>
    %cst_64 = arith.constant dense<0.000000e+00> : vector<16x32xf32>
    %224 = tpu.matmul %223, %222, %cst_64 {dimension_numbers = #tpu.dot_dimension_numbers<[1], [0], [0], [1], [0, 0, 1, 1], [], []>} : vector<16x32xbf16>, vector<32x32xbf16>, vector<16x32xf32> -> vector<16x32xf32>
    %225 = vector.broadcast %175 : vector<1x32xf32> to vector<16x32xf32>
    %226 = arith.addf %224, %225 : vector<16x32xf32>
    %227 = arith.addf %172, %226 : vector<16x32xf32>
    %cst_65 = arith.constant dense<0.000000e+00> : vector<16xf32>
    %228 = vector.multi_reduction <add>, %227, %cst_65 [1] : vector<16x32xf32> to vector<16xf32>
    %229 = vector.shape_cast %228 : vector<16xf32> to vector<16x1xf32>
    %cst_66 = arith.constant 3.200000e+01 : f32
    %230 = vector.broadcast %cst_66 : f32 to vector<16x1xf32>
    %231 = arith.divf %229, %230 : vector<16x1xf32>
    %232 = vector.broadcast %231 : vector<16x1xf32> to vector<16x32xf32>
    %233 = arith.subf %227, %232 : vector<16x32xf32>
    %234 = arith.mulf %233, %233 : vector<16x32xf32>
    %cst_67 = arith.constant dense<0.000000e+00> : vector<16xf32>
    %235 = vector.multi_reduction <add>, %234, %cst_67 [1] : vector<16x32xf32> to vector<16xf32>
    %236 = vector.shape_cast %235 : vector<16xf32> to vector<16x1xf32>
    %cst_68 = arith.constant 3.200000e+01 : f32
    %237 = vector.broadcast %cst_68 : f32 to vector<16x1xf32>
    %238 = arith.divf %236, %237 : vector<16x1xf32>
    %239 = vector.broadcast %231 : vector<16x1xf32> to vector<16x32xf32>
    %240 = arith.subf %227, %239 : vector<16x32xf32>
    %cst_69 = arith.constant 9.99999996E-13 : f32
    %241 = vector.broadcast %cst_69 : f32 to vector<16x1xf32>
    %242 = arith.addf %238, %241 : vector<16x1xf32>
    %243 = math.rsqrt %242 : vector<16x1xf32>
    %244 = vector.broadcast %243 : vector<16x1xf32> to vector<16x32xf32>
    %245 = arith.mulf %240, %244 : vector<16x32xf32>
    %246 = vector.broadcast %176 : vector<1x32xf32> to vector<16x32xf32>
    %247 = arith.mulf %245, %246 : vector<16x32xf32>
    %248 = vector.broadcast %177 : vector<1x32xf32> to vector<16x32xf32>
    %249 = arith.addf %247, %248 : vector<16x32xf32>
    %c1_70 = arith.constant 1 : index
    %c0_71 = arith.constant 0 : index
    %c0_72 = arith.constant 0 : index
    %250 = vector.load %arg8[%c1_70, %c0_71, %c0_72] : memref<2x32x64xbf16, #tpu.memory_space<vmem>>, vector<1x32x64xbf16>
    %251 = vector.shape_cast %250 : vector<1x32x64xbf16> to vector<32x64xbf16>
    %252 = arith.truncf %249 : vector<16x32xf32> to vector<16x32xbf16>
    %cst_73 = arith.constant dense<0.000000e+00> : vector<16x64xf32>
    %253 = tpu.matmul %252, %251, %cst_73 {dimension_numbers = #tpu.dot_dimension_numbers<[1], [0], [0], [1], [0, 0, 1, 1], [], []>} : vector<16x32xbf16>, vector<32x64xbf16>, vector<16x64xf32> -> vector<16x64xf32>
    %254 = vector.broadcast %178 : vector<1x64xf32> to vector<16x64xf32>
    %255 = arith.addf %253, %254 : vector<16x64xf32>
    %256 = arith.mulf %255, %255 : vector<16x64xf32>
    %257 = arith.mulf %255, %256 : vector<16x64xf32>
    %cst_74 = arith.constant 4.471500e-02 : f32
    %258 = vector.broadcast %cst_74 : f32 to vector<16x64xf32>
    %259 = arith.mulf %258, %257 : vector<16x64xf32>
    %260 = arith.addf %255, %259 : vector<16x64xf32>
    %cst_75 = arith.constant 0.797884583 : f32
    %261 = vector.broadcast %cst_75 : f32 to vector<16x64xf32>
    %262 = arith.mulf %261, %260 : vector<16x64xf32>
    %263 = math.tanh %262 : vector<16x64xf32>
    %cst_76 = arith.constant 1.000000e+00 : f32
    %264 = vector.broadcast %cst_76 : f32 to vector<16x64xf32>
    %265 = arith.addf %264, %263 : vector<16x64xf32>
    %cst_77 = arith.constant 5.000000e-01 : f32
    %266 = vector.broadcast %cst_77 : f32 to vector<16x64xf32>
    %267 = arith.mulf %266, %265 : vector<16x64xf32>
    %268 = arith.mulf %255, %267 : vector<16x64xf32>
    %c1_78 = arith.constant 1 : index
    %c0_79 = arith.constant 0 : index
    %c0_80 = arith.constant 0 : index
    %269 = vector.load %arg9[%c1_78, %c0_79, %c0_80] : memref<2x64x32xbf16, #tpu.memory_space<vmem>>, vector<1x64x32xbf16>
    %270 = vector.shape_cast %269 : vector<1x64x32xbf16> to vector<64x32xbf16>
    %271 = arith.truncf %268 : vector<16x64xf32> to vector<16x64xbf16>
    %cst_81 = arith.constant dense<0.000000e+00> : vector<16x32xf32>
    %272 = tpu.matmul %271, %270, %cst_81 {dimension_numbers = #tpu.dot_dimension_numbers<[1], [0], [0], [1], [0, 0, 1, 1], [], []>} : vector<16x64xbf16>, vector<64x32xbf16>, vector<16x32xf32> -> vector<16x32xf32>
    %273 = vector.broadcast %179 : vector<1x32xf32> to vector<16x32xf32>
    %274 = arith.addf %272, %273 : vector<16x32xf32>
    %275 = arith.addf %249, %274 : vector<16x32xf32>
    %cst_82 = arith.constant dense<0.000000e+00> : vector<16xf32>
    %276 = vector.multi_reduction <add>, %275, %cst_82 [1] : vector<16x32xf32> to vector<16xf32>
    %277 = vector.shape_cast %276 : vector<16xf32> to vector<16x1xf32>
    %cst_83 = arith.constant 3.200000e+01 : f32
    %278 = vector.broadcast %cst_83 : f32 to vector<16x1xf32>
    %279 = arith.divf %277, %278 : vector<16x1xf32>
    %280 = vector.broadcast %279 : vector<16x1xf32> to vector<16x32xf32>
    %281 = arith.subf %275, %280 : vector<16x32xf32>
    %282 = arith.mulf %281, %281 : vector<16x32xf32>
    %cst_84 = arith.constant dense<0.000000e+00> : vector<16xf32>
    %283 = vector.multi_reduction <add>, %282, %cst_84 [1] : vector<16x32xf32> to vector<16xf32>
    %284 = vector.shape_cast %283 : vector<16xf32> to vector<16x1xf32>
    %cst_85 = arith.constant 3.200000e+01 : f32
    %285 = vector.broadcast %cst_85 : f32 to vector<16x1xf32>
    %286 = arith.divf %284, %285 : vector<16x1xf32>
    %287 = vector.broadcast %279 : vector<16x1xf32> to vector<16x32xf32>
    %288 = arith.subf %275, %287 : vector<16x32xf32>
    %cst_86 = arith.constant 9.99999996E-13 : f32
    %289 = vector.broadcast %cst_86 : f32 to vector<16x1xf32>
    %290 = arith.addf %286, %289 : vector<16x1xf32>
    %291 = math.rsqrt %290 : vector<16x1xf32>
    %292 = vector.broadcast %291 : vector<16x1xf32> to vector<16x32xf32>
    %293 = arith.mulf %288, %292 : vector<16x32xf32>
    %294 = vector.broadcast %180 : vector<1x32xf32> to vector<16x32xf32>
    %295 = arith.mulf %293, %294 : vector<16x32xf32>
    %296 = vector.broadcast %181 : vector<1x32xf32> to vector<16x32xf32>
    %297 = arith.addf %295, %296 : vector<16x32xf32>
    %298 = vector.shape_cast %297 : vector<16x32xf32> to vector<2x8x32xf32>
    %cst_87 = arith.constant dense<0.000000e+00> : vector<2x32xf32>
    %299 = vector.multi_reduction <add>, %298, %cst_87 [1] : vector<2x8x32xf32> to vector<2x32xf32>
    %cst_88 = arith.constant 8.000000e+00 : f32
    %300 = vector.broadcast %cst_88 : f32 to vector<2x32xf32>
    %301 = arith.divf %299, %300 : vector<2x32xf32>
    %c0_89 = arith.constant 0 : index
    %c0_90 = arith.constant 0 : index
    %302 = vector.load %arg10[%c0_89, %c0_90] : memref<32x512xbf16, #tpu.memory_space<vmem>>, vector<32x512xbf16>
    %303 = arith.truncf %301 : vector<2x32xf32> to vector<2x32xbf16>
    %cst_91 = arith.constant dense<0.000000e+00> : vector<2x512xf32>
    %304 = tpu.matmul %303, %302, %cst_91 {dimension_numbers = #tpu.dot_dimension_numbers<[1], [0], [0], [1], [0, 0, 1, 1], [], []>} : vector<2x32xbf16>, vector<32x512xbf16>, vector<2x512xf32> -> vector<2x512xf32>
    %305 = vector.broadcast %1 : vector<1x512xf32> to vector<2x512xf32>
    %306 = arith.addf %304, %305 : vector<2x512xf32>
    %cst_92 = arith.constant 0.000000e+00 : f32
    %307 = vector.broadcast %cst_92 : f32 to vector<2x512xf32>
    %308 = arith.maximumf %306, %307 : vector<2x512xf32>
    %c0_93 = arith.constant 0 : index
    %c0_94 = arith.constant 0 : index
    %309 = vector.load %arg11[%c0_93, %c0_94] : memref<512x256xbf16, #tpu.memory_space<vmem>>, vector<512x256xbf16>
    %310 = arith.truncf %308 : vector<2x512xf32> to vector<2x512xbf16>
    %cst_95 = arith.constant dense<0.000000e+00> : vector<2x256xf32>
    %311 = tpu.matmul %310, %309, %cst_95 {dimension_numbers = #tpu.dot_dimension_numbers<[1], [0], [0], [1], [0, 0, 1, 1], [], []>} : vector<2x512xbf16>, vector<512x256xbf16>, vector<2x256xf32> -> vector<2x256xf32>
    %312 = vector.broadcast %2 : vector<1x256xf32> to vector<2x256xf32>
    %313 = arith.addf %311, %312 : vector<2x256xf32>
    %cst_96 = arith.constant 0.000000e+00 : f32
    %314 = vector.broadcast %cst_96 : f32 to vector<2x256xf32>
    %315 = arith.maximumf %313, %314 : vector<2x256xf32>
    %316 = vector.broadcast %3 : vector<1x256xf32> to vector<2x256xf32>
    %317 = arith.mulf %315, %316 : vector<2x256xf32>
    %cst_97 = arith.constant dense<0.000000e+00> : vector<2xf32>
    %318 = vector.multi_reduction <add>, %317, %cst_97 [1] : vector<2x256xf32> to vector<2xf32>
    %319 = vector.shape_cast %318 : vector<2xf32> to vector<2x1xf32>
    %320 = vector.broadcast %4 : vector<1x1xf32> to vector<2x1xf32>
    %321 = arith.addf %319, %320 : vector<2x1xf32>
    %c0_98 = arith.constant 0 : index
    %c0_99 = arith.constant 0 : index
    %322 = vector.load %arg12[%c0_98, %c0_99] : memref<2x1xf32, #tpu.memory_space<vmem>>, vector<2x1xf32>
    tpu.vector_store %arg12[%c0_98, %c0_99], %321 {strides = array<i32>} : memref<2x1xf32, #tpu.memory_space<vmem>>, vector<2x1xf32>,
    return
  }
}

</mosaic_0001>

<llo_original>
// kernel: forward.1
$region0: #{forward.1}
  #allocation0 [shape = 'u32[]', space=smem, size = 0x4, offset = 0x4, fixed_abs, tag = 'smem constant byte address 0x4 - core index']
  #allocation1 [shape = 'u32[72,128]{1,0:T(1,128)}', space=vmem, size = 0x9000, scoped, tag = 'internal scratch']
  %s0 = inlined_call_operand.vmem [shape: s32[16,1], index: 0, kind: input, shape index: {}]
  %s1 = inlined_call_operand.vmem [shape: s32[2,8], index: 1, kind: input, shape index: {}]
  %s2 = inlined_call_operand.vmem [shape: f32[100,32], index: 2, kind: input, shape index: {}]
  %s3 = inlined_call_operand.vmem [shape: f32[16,32], index: 3, kind: input, shape index: {}]
  %s4 = inlined_call_operand.hbm [shape: f32[16,128], index: 4, kind: input, shape index: {}]
  %s5 = inlined_call_operand.vmem [shape: f32[6,512], index: 5, kind: input, shape index: {}]
  %s6 = inlined_call_operand.vmem [shape: bf16[2,32,96], index: 6, kind: input, shape index: {}]
  %s7 = inlined_call_operand.vmem [shape: bf16[2,32,32], index: 7, kind: input, shape index: {}]
  %s8 = inlined_call_operand.vmem [shape: bf16[2,32,64], index: 8, kind: input, shape index: {}]
  %s9 = inlined_call_operand.vmem [shape: bf16[2,64,32], index: 9, kind: input, shape index: {}]
  %s10 = inlined_call_operand.vmem [shape: bf16[32,512], index: 10, kind: input, shape index: {}]
  %s11 = inlined_call_operand.hbm [shape: bf16[512,256], index: 11, kind: input, shape index: {}]
  %s12 = inlined_call_operand.vmem [shape: f32[2,1], index: 12, kind: output, shape index: {}]
  %s13 = sld [smem:[#allocation0]]
  $region66: #{forward.1} parent=0
    _
  %s15 = ssub.s32 1, %s13
  %s16 = scalar_select 0, %s15, %s13
  $region1: #{forward.1} parent=0
    #allocation2 [shape = 'u8[8192]{0}', space=vmem, size = 0x2000, scoped, tag = 'input window, operand 4, single buffered']
    #allocation3 [shape = 's32[1]{0}', space=sflag, size = 0x4, scoped, tag = 'scoped memory for forward.1']
    #allocation4 [shape = 'u8[262144]{0}', space=vmem, size = 0x40000, scoped, tag = 'input window, operand 11, single buffered']
    #allocation5 [shape = 's32[1]{0}', space=sflag, size = 0x4, scoped, tag = 'scoped memory for forward.1']
    %17 = vsyncpa [#allocation3], 0
    %18 = vsyncpa [#allocation5], 0
    // Predicated region
    $region2: #{forward.1} parent=1 // pred_check
      _
    $region3: #{forward.1} parent=1 // pred_check_branch
      %20 = sbr.rel (0) target = $region5
    $region4: #{forward.1} parent=1 // pred_region
      _
    $region5: #{forward.1} parent=1 // pred_fallthru
      _
    // Predicated region
    $region6: #{forward.1} parent=1 // pred_check
      _
    $region7: #{forward.1} parent=1 // pred_check_branch
      %22 = sbr.rel (0) target = $region9
    $region8: #{forward.1} parent=1 // pred_region
      _
    $region9: #{forward.1} parent=1 // pred_fallthru
      _
    // Predicated region
    $region10: #{forward.1} parent=1 // pred_check
      _
    $region11: #{forward.1} parent=1 // pred_check_branch
      %24 = sbr.rel (0) target = $region13
    $region12: #{forward.1} parent=1 // pred_region
      _
    $region13: #{forward.1} parent=1 // pred_fallthru
      _
    // Predicated region
    $region14: #{forward.1} parent=1 // pred_check
      _
    $region15: #{forward.1} parent=1 // pred_check_branch
      %26 = sbr.rel (0) target = $region17
    $region16: #{forward.1} parent=1 // pred_region
      _
    $region17: #{forward.1} parent=1 // pred_fallthru
      _
    // Predicated region
    $region18: #{forward.1} parent=1 // pred_check
      _
    $region19: #{forward.1} parent=1 // pred_check_branch
      %28 = sbr.rel (0) target = $region21
    $region20: #{forward.1} parent=1 // pred_region
      %30 = vsyncadd [#allocation3], 0
      %s31 = sshll.u32 %s4, 4
      %s32 = int_to_ptr.hbm [resolvable:$true] %s31
      %s33 = sshll.u32 [#allocation2], 4
      %s34 = int_to_ptr.vmem [resolvable:$true] %s33
      %39 = dma.hbm_to_vmem [thread:$0]  %s32, 256, %s34, [#allocation3], 128, 128, 8
    $region21: #{forward.1} parent=1 // pred_fallthru
      _
    // Predicated region
    $region22: #{forward.1} parent=1 // pred_check
      _
    $region23: #{forward.1} parent=1 // pred_check_branch
      %41 = sbr.rel (0) target = $region25
    $region24: #{forward.1} parent=1 // pred_region
      _
    $region25: #{forward.1} parent=1 // pred_fallthru
      _
    // Predicated region
    $region26: #{forward.1} parent=1 // pred_check
      _
    $region27: #{forward.1} parent=1 // pred_check_branch
      %43 = sbr.rel (0) target = $region29
    $region28: #{forward.1} parent=1 // pred_region
      _
    $region29: #{forward.1} parent=1 // pred_fallthru
      _
    // Predicated region
    $region30: #{forward.1} parent=1 // pred_check
      _
    $region31: #{forward.1} parent=1 // pred_check_branch
      %45 = sbr.rel (0) target = $region33
    $region32: #{forward.1} parent=1 // pred_region
      _
    $region33: #{forward.1} parent=1 // pred_fallthru
      _
    // Predicated region
    $region34: #{forward.1} parent=1 // pred_check
      _
    $region35: #{forward.1} parent=1 // pred_check_branch
      %47 = sbr.rel (0) target = $region37
    $region36: #{forward.1} parent=1 // pred_region
      _
    $region37: #{forward.1} parent=1 // pred_fallthru
      _
    // Predicated region
    $region38: #{forward.1} parent=1 // pred_check
      _
    $region39: #{forward.1} parent=1 // pred_check_branch
      %49 = sbr.rel (0) target = $region41
    $region40: #{forward.1} parent=1 // pred_region
      _
    $region41: #{forward.1} parent=1 // pred_fallthru
      _
    // Predicated region
    $region42: #{forward.1} parent=1 // pred_check
      _
    $region43: #{forward.1} parent=1 // pred_check_branch
      %51 = sbr.rel (0) target = $region45
    $region44: #{forward.1} parent=1 // pred_region
      _
    $region45: #{forward.1} parent=1 // pred_fallthru
      _
    // Predicated region
    $region46: #{forward.1} parent=1 // pred_check
      _
    $region47: #{forward.1} parent=1 // pred_check_branch
      %53 = sbr.rel (0) target = $region49
    $region48: #{forward.1} parent=1 // pred_region
      %55 = vsyncadd [#allocation5], 0
      %s56 = sshll.u32 %s11, 4
      %s57 = int_to_ptr.hbm [resolvable:$true] %s56
      %s58 = sshll.u32 [#allocation4], 4
      %s59 = int_to_ptr.vmem [resolvable:$true] %s58
      %64 = dma.hbm_to_vmem [thread:$0]  %s57, 8192, %s59, [#allocation5], 128, 128, 8
    $region49: #{forward.1} parent=1 // pred_fallthru
      _
    // Predicated region
    $region50: #{forward.1} parent=1 // pred_check
      _
    $region51: #{forward.1} parent=1 // pred_check_branch
      %66 = sbr.rel (0) target = $region53
    $region52: #{forward.1} parent=1 // pred_region
      %68 = dma.done [#allocation3], 256
    $region53: #{forward.1} parent=1 // pred_fallthru
      _
    // Predicated region
    $region54: #{forward.1} parent=1 // pred_check
      _
    $region55: #{forward.1} parent=1 // pred_check_branch
      %70 = sbr.rel (0) target = $region57
    $region56: #{forward.1} parent=1 // pred_region
      %72 = dma.done [#allocation5], 8192
    $region57: #{forward.1} parent=1 // pred_fallthru
      _
    %v74 = vld [vmem:[%s5] sm:$0x3f]
    %v75 = vld [vmem:[%s5 + $0x8] sm:$0x3f]
    %v76 = vld [vmem:[%s5 + $0x10] sm:$0x3f]
    %v77 = vld [vmem:[%s5 + $0x18] sm:$0x3f]
    %v78 = vld [vmem:[#allocation2] sm:$0xff]
    %v79 = vld [vmem:[#allocation2 + $0x8] sm:$0xff]
    %v80 = vld [vmem:[%s0] sm:$0xff]
    %v81 = vld [vmem:[%s0 + $0x8] sm:$0xff]
    %v82 = vlaneseq
    %v83 = vand.u32 %v82, 127
    %84 = vset.pattern.permute.xlu0 0
    %85 = vperm.xlu0 %84, %v80
    %v86 = vpop.permute.xlu0 %85
    %87 = vset.pattern.permute.xlu0 0
    %88 = vperm.xlu0 %87, %v81
    %v89 = vpop.permute.xlu0 %88
    %vm90 = vcmp.eq.s32.totalorder %v86, %v83
    %vm91 = vcmp.eq.s32.totalorder %v89, %v83
    %v92 = vsel %vm90, 1.0, 0.0
    %v93 = vsel %vm91, 1.0, 0.0
    %v94 = vld [vmem:[%s2] sm:$0xff]
    %v95 = vld [vmem:[%s2 + $0x8] sm:$0xff]
    %v96 = vld [vmem:[%s2 + $0x10] sm:$0xff]
    %v97 = vld [vmem:[%s2 + $0x18] sm:$0xff]
    %v98 = vld [vmem:[%s2 + $0x20] sm:$0xff]
    %v99 = vld [vmem:[%s2 + $0x28] sm:$0xff]
    %v100 = vld [vmem:[%s2 + $0x30] sm:$0xff]
    %v101 = vld [vmem:[%s2 + $0x38] sm:$0xff]
    %v102 = vld [vmem:[%s2 + $0x40] sm:$0xff]
    %v103 = vld [vmem:[%s2 + $0x48] sm:$0xff]
    %v104 = vld [vmem:[%s2 + $0x50] sm:$0xff]
    %v105 = vld [vmem:[%s2 + $0x58] sm:$0xff]
    %v106 = vld [vmem:[%s2 + $0x60] sm:$0xf]
    %v107 = vld [vmem:[%s3] sm:$0xff]
    %v108 = vld [vmem:[%s3 + $0x8] sm:$0xff]
    %vm109 = vcmask 818176
    %v111 = vsel %vm109, %v92, 0
    %v114 = vsel %vm109, %v93, 0
    %vm116 = vcmask 1043456
    %v118 = vsel %vm116, %v106, 0
    %120 = vmatpush.msra.mxu0 0.0
    %121 = vmatpush.msra.mxu0 0.0
    %122 = vmatpush.msra.mxu0 0.0
    %123 = vmatpush.msra.mxu0 %v118
    %124 = vmatpush.msra.mxu0 %v105
    %125 = vmatpush.msra.mxu0 %v104
    %126 = vmatpush.msra.mxu0 %v103
    %127 = vmatpush.msra.mxu0 %v102
    %128 = vmatpush.msra.mxu0 %v101
    %129 = vmatpush.msra.mxu0 %v100
    %130 = vmatpush.msra.mxu0 %v99
    %131 = vmatpush.msra.mxu0 %v98
    %132 = vmatpush.msra.mxu0 %v97
    %133 = vmatpush.msra.mxu0 %v96
    %134 = vmatpush.msra.mxu0 %v95
    %135 = vmatpush.msra.mxu0 %v94
    %136 = vmatmul.f32.gmra.mxu0 %v111
    %v137 = vpop.f32.mrf.mxu0
    %v138 = vadd.f32 %v107, %v137
    %139 = vmatmul.f32.gmra.mxu0 %v114
    %v140 = vpop.f32.mrf.mxu0
    %v141 = vadd.f32 %v108, %v140
    %142 = vdwg.mxu0
    %vm143 = vcmask 261120
    %v144 = vsel %vm143, %v138, 0.0
    %145 = vadd.xlane.f32.xlu0 %v144
    %v146 = vpop.xlane.xlu0 %145
    %v147 = vsel %vm143, %v141, 0.0
    %148 = vadd.xlane.f32.xlu0 %v147
    %v149 = vpop.xlane.xlu0 %148
    %v150 = vrcp.pop 32.0
    %v151 = vmul.f32 32.0, %v150
    %v152 = vsub.f32 1.0, %v151
    %v153 = vmul.f32 %v150, %v152
    %v154 = vadd.f32 %v150, %v153
    %vm155 = vweird.f32 %v150
    %v156 = vsel %vm155, %v150, %v154
    %v157 = vmul.f32 %v146, %v156
    %v158 = vmul.f32 %v149, %v156
    %v159 = vsub.f32 %v138, %v157
    %v160 = vsub.f32 %v141, %v158
    %v161 = vmul.f32 %v159, %v159
    %v162 = vmul.f32 %v160, %v160
    %v163 = vsel %vm143, %v161, 0.0
    %164 = vadd.xlane.f32.xlu0 %v163
    %v165 = vpop.xlane.xlu0 %164
    %v166 = vsel %vm143, %v162, 0.0
    %167 = vadd.xlane.f32.xlu0 %v166
    %v168 = vpop.xlane.xlu0 %167
    %v169 = vmul.f32 %v165, %v156
    %v170 = vmul.f32 %v168, %v156
    %v171 = vadd.f32 %v169, 1e-12
    %v172 = vadd.f32 %v170, 1e-12
    %v173 = vrsqrt.pop %v171
    %v174 = vmul.f32 %v173, %v171
    %v175 = vmul.f32 %v174, %v173
    %v176 = vmul.f32 0.5, %v175
    %v177 = vsub.f32 1.5, %v176
    %v178 = vmul.f32 %v173, %v177
    %vm179 = vweird.f32 %v171
    %vm180 = vweird.f32 %v173
    %vm181 = vmor %vm179, %vm180
    %v182 = vsel %vm181, %v173, %v178
    %v183 = vrsqrt.pop %v172
    %v184 = vmul.f32 %v183, %v172
    %v185 = vmul.f32 %v184, %v183
    %v186 = vmul.f32 0.5, %v185
    %v187 = vsub.f32 1.5, %v186
    %v188 = vmul.f32 %v183, %v187
    %vm189 = vweird.f32 %v172
    %vm190 = vweird.f32 %v183
    %vm191 = vmor %vm189, %vm190
    %v192 = vsel %vm191, %v183, %v188
    %v193 = vmul.f32 %v159, %v182
    %v194 = vmul.f32 %v160, %v192
    %v195 = vperm.slane %v74, 4
    %v196 = vmul.f32 %v193, %v195
    %v197 = vmul.f32 %v194, %v195
    %v198 = vperm.slane %v74, 5
    %v199 = vadd.f32 %v196, %v198
    %v200 = vadd.f32 %v197, %v198
    %v201 = vld [vmem:[%s1] sm:$0x3]
    %v202 = vcvt.s32.f32 %v201
    %v203 = vsub.f32 1.0, %v202
    %v204 = vmul.f32 %v203, -1e+09
    %v206 = vrot.slane %v204, 6
    %vm208 = vcmask 1041408
    %v209 = vsel %vm208, %v204, %v206
    %v210 = vld [vmem:[%s6] sm:$0xf]
    %v211 = vld [vmem:[%s6 + $0x4] sm:$0xf]
    %v212 = vld [vmem:[%s6 + $0x8] sm:$0xf]
    %v213 = vld [vmem:[%s6 + $0xc] sm:$0xf]
    %v214 = vpack.c.bf16 %v200, %v199
    %v215 = vperm.slane %v78, 0
    %v220 = vunpack.c.l.b16 %v210
    %v221 = vunpack.c.l.b16 %v211
    %v222 = vunpack.c.l.b16 %v212
    %v223 = vunpack.c.l.b16 %v213
    %v224 = vpack.c.b16 %v221, %v220
    %v225 = vpack.c.b16 %v223, %v222
    %v229 = vsel %vm143, %v214, 0
    %231 = vmatpush.bf16.msra.mxu0 0
    %232 = vmatpush.bf16.msra.mxu0 0
    %233 = vmatpush.bf16.msra.mxu0 0
    %234 = vmatpush.bf16.msra.mxu0 0
    %235 = vmatpush.bf16.msra.mxu0 0
    %236 = vmatpush.bf16.msra.mxu0 0
    %237 = vmatpush.bf16.msra.mxu0 %v225
    %238 = vmatpush.bf16.msra.mxu0 %v224
    %239 = vmatmul.bf16.gmra.mxu0 %v229
    %v240 = vpop.f32.mrf.mxu0
    %v241 = vadd.f32 %v215, %v240
    %v242 = vpop.f32.mrf.mxu0
    %v243 = vadd.f32 %v215, %v242
    %244 = vdwg.mxu0
    %247 = vrot.lane.b32.xlu0 %v241, 112
    %v248 = vpop.permute.xlu0 %247
    %249 = vrot.lane.b32.xlu0 %v243, 112
    %v250 = vpop.permute.xlu0 %249
    %v253 = vpack.c.bf16 %v241, %v241
    %v254 = vpack.c.bf16 %v243, %v243
    %v255 = vpack.c.bf16 %v248, %v248
    %v256 = vpack.c.bf16 %v250, %v250
    %v258 = vrot.slane %v209, 1
    %v259 = vrot.slane %v209, 2
    %v260 = vrot.slane %v209, 3
    %v261 = vperm.slane %v209, 0
    %v262 = vperm.slane %v258, 0
    %v263 = vperm.slane %v259, 0
    %v264 = vperm.slane %v260, 0
    %v270 = vunpack.c.l.b16 %v253
    %v271 = vpack.c.b16 %v270, %v270
    %272 = vrot.lane.b32.xlu0 %v271, 96
    %v273 = vpop.permute.xlu0 %272
    %vm274 = vcmask 130048
    %v276 = vsel %vm274, %v253, 0
    %v279 = vsel %vm274, %v273, 0
    %281 = vmatpush.bf16.xpose.msra.mxu0 0
    %282 = vmatpush.bf16.xpose.msra.mxu0 0
    %283 = vmatpush.bf16.xpose.msra.mxu0 0
    %284 = vmatpush.bf16.xpose.msra.mxu0 0
    %285 = vmatpush.bf16.xpose.msra.mxu0 0
    %286 = vmatpush.bf16.xpose.msra.mxu0 0
    %287 = vmatpush.bf16.xpose.msra.mxu0 0
    %288 = vmatpush.bf16.xpose.msra.mxu0 %v279
    %289 = vmatmul.bf16.gmra.mxu0 %v276
    %v290 = vpop.f32.mrf.mxu0
    %v291 = vadd.f32 %v261, %v290
    %v292 = vpop.f32.mrf.mxu0
    %293 = vdwg.mxu0
    %v295 = vunpack.c.l.b16 %v254
    %v296 = vpack.c.b16 %v295, %v295
    %297 = vrot.lane.b32.xlu0 %v296, 96
    %v298 = vpop.permute.xlu0 %297
    %v300 = vsel %vm274, %v254, 0
    %v303 = vsel %vm274, %v298, 0
    %305 = vmatpush.bf16.xpose.msra.mxu0 0
    %306 = vmatpush.bf16.xpose.msra.mxu0 0
    %307 = vmatpush.bf16.xpose.msra.mxu0 0
    %308 = vmatpush.bf16.xpose.msra.mxu0 0
    %309 = vmatpush.bf16.xpose.msra.mxu0 0
    %310 = vmatpush.bf16.xpose.msra.mxu0 0
    %311 = vmatpush.bf16.xpose.msra.mxu0 0
    %312 = vmatpush.bf16.xpose.msra.mxu0 %v303
    %313 = vmatmul.bf16.gmra.mxu0 %v300
    %v314 = vpop.f32.mrf.mxu0
    %v315 = vadd.f32 %v262, %v314
    %v316 = vpop.f32.mrf.mxu0
    %317 = vdwg.mxu0
    %v319 = vunpack.c.l.b16 %v255
    %v320 = vpack.c.b16 %v319, %v319
    %321 = vrot.lane.b32.xlu0 %v320, 96
    %v322 = vpop.permute.xlu0 %321
    %v324 = vsel %vm274, %v255, 0
    %v327 = vsel %vm274, %v322, 0
    %329 = vmatpush.bf16.xpose.msra.mxu0 0
    %330 = vmatpush.bf16.xpose.msra.mxu0 0
    %331 = vmatpush.bf16.xpose.msra.mxu0 0
    %332 = vmatpush.bf16.xpose.msra.mxu0 0
    %333 = vmatpush.bf16.xpose.msra.mxu0 0
    %334 = vmatpush.bf16.xpose.msra.mxu0 0
    %335 = vmatpush.bf16.xpose.msra.mxu0 0
    %336 = vmatpush.bf16.xpose.msra.mxu0 %v327
    %337 = vmatmul.bf16.gmra.mxu0 %v324
    %v338 = vpop.f32.mrf.mxu0
    %v339 = vadd.f32 %v263, %v338
    %v340 = vpop.f32.mrf.mxu0
    %341 = vdwg.mxu0
    %v343 = vunpack.c.l.b16 %v256
    %v344 = vpack.c.b16 %v343, %v343
    %345 = vrot.lane.b32.xlu0 %v344, 96
    %v346 = vpop.permute.xlu0 %345
    %v348 = vsel %vm274, %v256, 0
    %v351 = vsel %vm274, %v346, 0
    %353 = vmatpush.bf16.xpose.msra.mxu0 0
    %354 = vmatpush.bf16.xpose.msra.mxu0 0
    %355 = vmatpush.bf16.xpose.msra.mxu0 0
    %356 = vmatpush.bf16.xpose.msra.mxu0 0
    %357 = vmatpush.bf16.xpose.msra.mxu0 0
    %358 = vmatpush.bf16.xpose.msra.mxu0 0
    %359 = vmatpush.bf16.xpose.msra.mxu0 0
    %360 = vmatpush.bf16.xpose.msra.mxu0 %v351
    %361 = vmatmul.bf16.gmra.mxu0 %v348
    %v362 = vpop.f32.mrf.mxu0
    %v363 = vadd.f32 %v264, %v362
    %v364 = vpop.f32.mrf.mxu0
    %365 = vdwg.mxu0
    %vm366 = vcmask 64512
    %v367 = vsel %vm366, %v291, -inf
    %368 = vmax.xlane.f32.xlu0 %v367
    %v369 = vpop.xlane.xlu0 %368
    %v370 = vsel %vm366, %v315, -inf
    %371 = vmax.xlane.f32.xlu0 %v370
    %v372 = vpop.xlane.xlu0 %371
    %v373 = vsel %vm366, %v339, -inf
    %374 = vmax.xlane.f32.xlu0 %v373
    %v375 = vpop.xlane.xlu0 %374
    %v376 = vsel %vm366, %v363, -inf
    %377 = vmax.xlane.f32.xlu0 %v376
    %v378 = vpop.xlane.xlu0 %377
    %v379 = vsub.f32 %v291, %v369
    %v380 = vsub.f32 %v315, %v372
    %v381 = vsub.f32 %v339, %v375
    %v382 = vsub.f32 %v363, %v378
    %v383 = vmul.f32 %v379, 1.442695
    %v384 = vpow.pop %v383
    %v385 = vmul.f32 %v380, 1.442695
    %v386 = vpow.pop %v385
    %v387 = vmul.f32 %v381, 1.442695
    %v388 = vpow.pop %v387
    %v389 = vmul.f32 %v382, 1.442695
    %v390 = vpow.pop %v389
    %v391 = vsel %vm366, %v384, 0.0
    %392 = vadd.xlane.f32.xlu0 %v391
    %v393 = vpop.xlane.xlu0 %392
    %v394 = vsel %vm366, %v386, 0.0
    %395 = vadd.xlane.f32.xlu0 %v394
    %v396 = vpop.xlane.xlu0 %395
    %v397 = vsel %vm366, %v388, 0.0
    %398 = vadd.xlane.f32.xlu0 %v397
    %v399 = vpop.xlane.xlu0 %398
    %v400 = vsel %vm366, %v390, 0.0
    %401 = vadd.xlane.f32.xlu0 %v400
    %v402 = vpop.xlane.xlu0 %401
    %v403 = vrcp.pop %v393
    %v404 = vrcp.pop %v396
    %v405 = vrcp.pop %v399
    %v406 = vrcp.pop %v402
    %v407 = vmul.f32 %v384, %v403
    %v408 = vmul.f32 %v386, %v404
    %v409 = vmul.f32 %v388, %v405
    %v410 = vmul.f32 %v390, %v406
    %v411 = vpack.c.bf16 %v407, %v407
    %v412 = vpack.c.bf16 %v408, %v408
    %v413 = vpack.c.bf16 %v409, %v409
    %v414 = vpack.c.bf16 %v410, %v410
    %415 = vrot.lane.b32.xlu0 %v271, 64
    %v416 = vpop.permute.xlu0 %415
    %v418 = vsel %vm366, %v411, 0
    %v421 = vsel %vm116, %v416, 0
    %423 = vmatpush.bf16.msra.mxu0 0
    %424 = vmatpush.bf16.msra.mxu0 0
    %425 = vmatpush.bf16.msra.mxu0 0
    %426 = vmatpush.bf16.msra.mxu0 0
    %427 = vmatpush.bf16.msra.mxu0 0
    %428 = vmatpush.bf16.msra.mxu0 0
    %429 = vmatpush.bf16.msra.mxu0 0
    %430 = vmatpush.bf16.msra.mxu0 %v421
    %431 = vmatmul.bf16.gmra.mxu0 %v418
    %v432 = vpop.f32.mrf.mxu0
    %v433 = vadd.f32 0.0, %v432
    %v434 = vpop.f32.mrf.mxu0
    %435 = vdwg.mxu0
    %436 = vrot.lane.b32.xlu0 %v296, 64
    %v437 = vpop.permute.xlu0 %436
    %v439 = vsel %vm366, %v412, 0
    %v442 = vsel %vm116, %v437, 0
    %444 = vmatpush.bf16.msra.mxu0 0
    %445 = vmatpush.bf16.msra.mxu0 0
    %446 = vmatpush.bf16.msra.mxu0 0
    %447 = vmatpush.bf16.msra.mxu0 0
    %448 = vmatpush.bf16.msra.mxu0 0
    %449 = vmatpush.bf16.msra.mxu0 0
    %450 = vmatpush.bf16.msra.mxu0 0
    %451 = vmatpush.bf16.msra.mxu0 %v442
    %452 = vmatmul.bf16.gmra.mxu0 %v439
    %v453 = vpop.f32.mrf.mxu0
    %v454 = vadd.f32 0.0, %v453
    %v455 = vpop.f32.mrf.mxu0
    %456 = vdwg.mxu0
    %457 = vrot.lane.b32.xlu0 %v320, 64
    %v458 = vpop.permute.xlu0 %457
    %v460 = vsel %vm366, %v413, 0
    %v463 = vsel %vm116, %v458, 0
    %465 = vmatpush.bf16.msra.mxu0 0
    %466 = vmatpush.bf16.msra.mxu0 0
    %467 = vmatpush.bf16.msra.mxu0 0
    %468 = vmatpush.bf16.msra.mxu0 0
    %469 = vmatpush.bf16.msra.mxu0 0
    %470 = vmatpush.bf16.msra.mxu0 0
    %471 = vmatpush.bf16.msra.mxu0 0
    %472 = vmatpush.bf16.msra.mxu0 %v463
    %473 = vmatmul.bf16.gmra.mxu0 %v460
    %v474 = vpop.f32.mrf.mxu0
    %v475 = vadd.f32 0.0, %v474
    %v476 = vpop.f32.mrf.mxu0
    %477 = vdwg.mxu0
    %478 = vrot.lane.b32.xlu0 %v344, 64
    %v479 = vpop.permute.xlu0 %478
    %v481 = vsel %vm366, %v414, 0
    %v484 = vsel %vm116, %v479, 0
    %486 = vmatpush.bf16.msra.mxu0 0
    %487 = vmatpush.bf16.msra.mxu0 0
    %488 = vmatpush.bf16.msra.mxu0 0
    %489 = vmatpush.bf16.msra.mxu0 0
    %490 = vmatpush.bf16.msra.mxu0 0
    %491 = vmatpush.bf16.msra.mxu0 0
    %492 = vmatpush.bf16.msra.mxu0 0
    %493 = vmatpush.bf16.msra.mxu0 %v484
    %494 = vmatmul.bf16.gmra.mxu0 %v481
    %v495 = vpop.f32.mrf.mxu0
    %v496 = vadd.f32 0.0, %v495
    %v497 = vpop.f32.mrf.mxu0
    %498 = vdwg.mxu0
    %501 = vrot.lane.b32.xlu0 %v475, 16
    %v502 = vpop.permute.xlu0 %501
    %503 = vrot.lane.b32.xlu0 %v496, 16
    %v504 = vpop.permute.xlu0 %503
    %v507 = vsel %vm274, %v433, %v502
    %v508 = vsel %vm274, %v454, %v504
    %v509 = vld [vmem:[%s7] sm:$0xf]
    %v510 = vld [vmem:[%s7 + $0x4] sm:$0xf]
    %v511 = vld [vmem:[%s7 + $0x8] sm:$0xf]
    %v512 = vld [vmem:[%s7 + $0xc] sm:$0xf]
    %v513 = vpack.c.bf16 %v508, %v507
    %v514 = vperm.slane %v78, 1
    %v519 = vunpack.c.l.b16 %v509
    %v520 = vunpack.c.l.b16 %v510
    %v521 = vunpack.c.l.b16 %v511
    %v522 = vunpack.c.l.b16 %v512
    %v523 = vpack.c.b16 %v520, %v519
    %v524 = vpack.c.b16 %v522, %v521
    %v528 = vsel %vm143, %v513, 0
    %530 = vmatpush.bf16.msra.mxu0 0
    %531 = vmatpush.bf16.msra.mxu0 0
    %532 = vmatpush.bf16.msra.mxu0 0
    %533 = vmatpush.bf16.msra.mxu0 0
    %534 = vmatpush.bf16.msra.mxu0 0
    %535 = vmatpush.bf16.msra.mxu0 0
    %536 = vmatpush.bf16.msra.mxu0 %v524
    %537 = vmatpush.bf16.msra.mxu0 %v523
    %538 = vmatmul.bf16.gmra.mxu0 %v528
    %v539 = vpop.f32.mrf.mxu0
    %v540 = vadd.f32 %v514, %v539
    %v541 = vpop.f32.mrf.mxu0
    %v542 = vadd.f32 %v514, %v541
    %543 = vdwg.mxu0
    %v544 = vadd.f32 %v199, %v540
    %v545 = vadd.f32 %v200, %v542
    %v546 = vsel %vm143, %v544, 0.0
    %547 = vadd.xlane.f32.xlu0 %v546
    %v548 = vpop.xlane.xlu0 %547
    %v549 = vsel %vm143, %v545, 0.0
    %550 = vadd.xlane.f32.xlu0 %v549
    %v551 = vpop.xlane.xlu0 %550
    %v552 = vmul.f32 %v548, %v156
    %v553 = vmul.f32 %v551, %v156
    %v554 = vsub.f32 %v544, %v552
    %v555 = vsub.f32 %v545, %v553
    %v556 = vmul.f32 %v554, %v554
    %v557 = vmul.f32 %v555, %v555
    %v558 = vsel %vm143, %v556, 0.0
    %559 = vadd.xlane.f32.xlu0 %v558
    %v560 = vpop.xlane.xlu0 %559
    %v561 = vsel %vm143, %v557, 0.0
    %562 = vadd.xlane.f32.xlu0 %v561
    %v563 = vpop.xlane.xlu0 %562
    %v564 = vmul.f32 %v560, %v156
    %v565 = vmul.f32 %v563, %v156
    %v566 = vadd.f32 %v564, 1e-12
    %v567 = vadd.f32 %v565, 1e-12
    %v568 = vrsqrt.pop %v566
    %v569 = vmul.f32 %v568, %v566
    %v570 = vmul.f32 %v569, %v568
    %v571 = vmul.f32 0.5, %v570
    %v572 = vsub.f32 1.5, %v571
    %v573 = vmul.f32 %v568, %v572
    %vm574 = vweird.f32 %v566
    %vm575 = vweird.f32 %v568
    %vm576 = vmor %vm574, %vm575
    %v577 = vsel %vm576, %v568, %v573
    %v578 = vrsqrt.pop %v567
    %v579 = vmul.f32 %v578, %v567
    %v580 = vmul.f32 %v579, %v578
    %v581 = vmul.f32 0.5, %v580
    %v582 = vsub.f32 1.5, %v581
    %v583 = vmul.f32 %v578, %v582
    %vm584 = vweird.f32 %v567
    %vm585 = vweird.f32 %v578
    %vm586 = vmor %vm584, %vm585
    %v587 = vsel %vm586, %v578, %v583
    %v588 = vmul.f32 %v554, %v577
    %v589 = vmul.f32 %v555, %v587
    %v590 = vperm.slane %v78, 2
    %v591 = vmul.f32 %v588, %v590
    %v592 = vmul.f32 %v589, %v590
    %v593 = vperm.slane %v78, 3
    %v594 = vadd.f32 %v591, %v593
    %v595 = vadd.f32 %v592, %v593
    %v596 = vld [vmem:[%s8] sm:$0xf]
    %v597 = vld [vmem:[%s8 + $0x4] sm:$0xf]
    %v598 = vld [vmem:[%s8 + $0x8] sm:$0xf]
    %v599 = vld [vmem:[%s8 + $0xc] sm:$0xf]
    %v600 = vpack.c.bf16 %v595, %v594
    %v601 = vperm.slane %v78, 4
    %v606 = vunpack.c.l.b16 %v596
    %v607 = vunpack.c.l.b16 %v597
    %v608 = vunpack.c.l.b16 %v598
    %v609 = vunpack.c.l.b16 %v599
    %v610 = vpack.c.b16 %v607, %v606
    %v611 = vpack.c.b16 %v609, %v608
    %v615 = vsel %vm143, %v600, 0
    %617 = vmatpush.bf16.msra.mxu0 0
    %618 = vmatpush.bf16.msra.mxu0 0
    %619 = vmatpush.bf16.msra.mxu0 0
    %620 = vmatpush.bf16.msra.mxu0 0
    %621 = vmatpush.bf16.msra.mxu0 0
    %622 = vmatpush.bf16.msra.mxu0 0
    %623 = vmatpush.bf16.msra.mxu0 %v611
    %624 = vmatpush.bf16.msra.mxu0 %v610
    %625 = vmatmul.bf16.gmra.mxu0 %v615
    %v626 = vpop.f32.mrf.mxu0
    %v627 = vadd.f32 %v601, %v626
    %v628 = vpop.f32.mrf.mxu0
    %v629 = vadd.f32 %v601, %v628
    %630 = vdwg.mxu0
    %v631 = vmul.f32 %v627, %v627
    %v632 = vmul.f32 %v629, %v629
    %v633 = vmul.f32 %v627, %v631
    %v634 = vmul.f32 %v629, %v632
    %v635 = vmul.f32 %v633, 0.044715
    %v636 = vmul.f32 %v634, 0.044715
    %v637 = vadd.f32 %v627, %v635
    %v638 = vadd.f32 %v629, %v636
    %v639 = vmul.f32 %v637, 0.7978846
    %v640 = vmul.f32 %v638, 0.7978846
    %v641 = vtanh.pop %v639
    %v642 = vtanh.pop %v640
    %v643 = vadd.f32 %v641, 1.0
    %v644 = vadd.f32 %v642, 1.0
    %v645 = vmul.f32 %v643, 0.5
    %v646 = vmul.f32 %v644, 0.5
    %v647 = vmul.f32 %v627, %v645
    %v648 = vmul.f32 %v629, %v646
    %v649 = vld [vmem:[%s9] sm:$0xf]
    %v650 = vld [vmem:[%s9 + $0x4] sm:$0xf]
    %v651 = vld [vmem:[%s9 + $0x8] sm:$0xf]
    %v652 = vld [vmem:[%s9 + $0xc] sm:$0xf]
    %v653 = vld [vmem:[%s9 + $0x10] sm:$0xf]
    %v654 = vld [vmem:[%s9 + $0x14] sm:$0xf]
    %v655 = vld [vmem:[%s9 + $0x18] sm:$0xf]
    %v656 = vld [vmem:[%s9 + $0x1c] sm:$0xf]
    %v657 = vpack.c.bf16 %v648, %v647
    %v658 = vperm.slane %v78, 5
    %v667 = vunpack.c.l.b16 %v649
    %v668 = vunpack.c.l.b16 %v650
    %v669 = vunpack.c.l.b16 %v651
    %v670 = vunpack.c.l.b16 %v652
    %v671 = vunpack.c.l.b16 %v653
    %v672 = vunpack.c.l.b16 %v654
    %v673 = vunpack.c.l.b16 %v655
    %v674 = vunpack.c.l.b16 %v656
    %v675 = vpack.c.b16 %v668, %v667
    %v676 = vpack.c.b16 %v670, %v669
    %v677 = vpack.c.b16 %v672, %v671
    %v678 = vpack.c.b16 %v674, %v673
    %vm683 = vcmask 523264
    %v685 = vsel %vm683, %v657, 0
    %687 = vmatpush.bf16.msra.mxu0 0
    %688 = vmatpush.bf16.msra.mxu0 0
    %689 = vmatpush.bf16.msra.mxu0 0
    %690 = vmatpush.bf16.msra.mxu0 0
    %691 = vmatpush.bf16.msra.mxu0 %v678
    %692 = vmatpush.bf16.msra.mxu0 %v677
    %693 = vmatpush.bf16.msra.mxu0 %v676
    %694 = vmatpush.bf16.msra.mxu0 %v675
    %695 = vmatmul.bf16.gmra.mxu0 %v685
    %v696 = vpop.f32.mrf.mxu0
    %v697 = vadd.f32 %v658, %v696
    %v698 = vpop.f32.mrf.mxu0
    %v699 = vadd.f32 %v658, %v698
    %700 = vdwg.mxu0
    %v701 = vadd.f32 %v594, %v697
    %v702 = vadd.f32 %v595, %v699
    %v703 = vsel %vm143, %v701, 0.0
    %704 = vadd.xlane.f32.xlu0 %v703
    %v705 = vpop.xlane.xlu0 %704
    %v706 = vsel %vm143, %v702, 0.0
    %707 = vadd.xlane.f32.xlu0 %v706
    %v708 = vpop.xlane.xlu0 %707
    %v709 = vmul.f32 %v705, %v156
    %v710 = vmul.f32 %v708, %v156
    %v711 = vsub.f32 %v701, %v709
    %v712 = vsub.f32 %v702, %v710
    %v713 = vmul.f32 %v711, %v711
    %v714 = vmul.f32 %v712, %v712
    %v715 = vsel %vm143, %v713, 0.0
    %716 = vadd.xlane.f32.xlu0 %v715
    %v717 = vpop.xlane.xlu0 %716
    %v718 = vsel %vm143, %v714, 0.0
    %719 = vadd.xlane.f32.xlu0 %v718
    %v720 = vpop.xlane.xlu0 %719
    %v721 = vmul.f32 %v717, %v156
    %v722 = vmul.f32 %v720, %v156
    %v723 = vadd.f32 %v721, 1e-12
    %v724 = vadd.f32 %v722, 1e-12
    %v725 = vrsqrt.pop %v723
    %v726 = vmul.f32 %v725, %v723
    %v727 = vmul.f32 %v726, %v725
    %v728 = vmul.f32 0.5, %v727
    %v729 = vsub.f32 1.5, %v728
    %v730 = vmul.f32 %v725, %v729
    %vm731 = vweird.f32 %v723
    %vm732 = vweird.f32 %v725
    %vm733 = vmor %vm731, %vm732
    %v734 = vsel %vm733, %v725, %v730
    %v735 = vrsqrt.pop %v724
    %v736 = vmul.f32 %v735, %v724
    %v737 = vmul.f32 %v736, %v735
    %v738 = vmul.f32 0.5, %v737
    %v739 = vsub.f32 1.5, %v738
    %v740 = vmul.f32 %v735, %v739
    %vm741 = vweird.f32 %v724
    %vm742 = vweird.f32 %v735
    %vm743 = vmor %vm741, %vm742
    %v744 = vsel %vm743, %v735, %v740
    %v745 = vmul.f32 %v711, %v734
    %v746 = vmul.f32 %v712, %v744
    %v747 = vperm.slane %v78, 6
    %v748 = vmul.f32 %v745, %v747
    %v749 = vmul.f32 %v746, %v747
    %v750 = vperm.slane %v78, 7
    %v751 = vadd.f32 %v748, %v750
    %v752 = vadd.f32 %v749, %v750
    %s753 = scalar_lea.vmem %s6, 16
    %v754 = vld [vmem:[%s753] sm:$0xf]
    %v755 = vld [vmem:[%s753 + $0x4] sm:$0xf]
    %v756 = vld [vmem:[%s753 + $0x8] sm:$0xf]
    %v757 = vld [vmem:[%s753 + $0xc] sm:$0xf]
    %v758 = vpack.c.bf16 %v752, %v751
    %v759 = vperm.slane %v79, 0
    %v764 = vunpack.c.l.b16 %v754
    %v765 = vunpack.c.l.b16 %v755
    %v766 = vunpack.c.l.b16 %v756
    %v767 = vunpack.c.l.b16 %v757
    %v768 = vpack.c.b16 %v765, %v764
    %v769 = vpack.c.b16 %v767, %v766
    %v773 = vsel %vm143, %v758, 0
    %775 = vmatpush.bf16.msra.mxu0 0
    %776 = vmatpush.bf16.msra.mxu0 0
    %777 = vmatpush.bf16.msra.mxu0 0
    %778 = vmatpush.bf16.msra.mxu0 0
    %779 = vmatpush.bf16.msra.mxu0 0
    %780 = vmatpush.bf16.msra.mxu0 0
    %781 = vmatpush.bf16.msra.mxu0 %v769
    %782 = vmatpush.bf16.msra.mxu0 %v768
    %783 = vmatmul.bf16.gmra.mxu0 %v773
    %v784 = vpop.f32.mrf.mxu0
    %v785 = vadd.f32 %v759, %v784
    %v786 = vpop.f32.mrf.mxu0
    %v787 = vadd.f32 %v759, %v786
    %788 = vdwg.mxu0
    %791 = vrot.lane.b32.xlu0 %v785, 112
    %v792 = vpop.permute.xlu0 %791
    %793 = vrot.lane.b32.xlu0 %v787, 112
    %v794 = vpop.permute.xlu0 %793
    %v797 = vpack.c.bf16 %v785, %v785
    %v798 = vpack.c.bf16 %v787, %v787
    %v799 = vpack.c.bf16 %v792, %v792
    %v800 = vpack.c.bf16 %v794, %v794
    %v802 = vunpack.c.l.b16 %v797
    %v803 = vpack.c.b16 %v802, %v802
    %804 = vrot.lane.b32.xlu0 %v803, 96
    %v805 = vpop.permute.xlu0 %804
    %v807 = vsel %vm274, %v797, 0
    %v810 = vsel %vm274, %v805, 0
    %812 = vmatpush.bf16.xpose.msra.mxu0 0
    %813 = vmatpush.bf16.xpose.msra.mxu0 0
    %814 = vmatpush.bf16.xpose.msra.mxu0 0
    %815 = vmatpush.bf16.xpose.msra.mxu0 0
    %816 = vmatpush.bf16.xpose.msra.mxu0 0
    %817 = vmatpush.bf16.xpose.msra.mxu0 0
    %818 = vmatpush.bf16.xpose.msra.mxu0 0
    %819 = vmatpush.bf16.xpose.msra.mxu0 %v810
    %820 = vmatmul.bf16.gmra.mxu0 %v807
    %v821 = vpop.f32.mrf.mxu0
    %v822 = vadd.f32 %v261, %v821
    %v823 = vpop.f32.mrf.mxu0
    %824 = vdwg.mxu0
    %v826 = vunpack.c.l.b16 %v798
    %v827 = vpack.c.b16 %v826, %v826
    %828 = vrot.lane.b32.xlu0 %v827, 96
    %v829 = vpop.permute.xlu0 %828
    %v831 = vsel %vm274, %v798, 0
    %v834 = vsel %vm274, %v829, 0
    %836 = vmatpush.bf16.xpose.msra.mxu0 0
    %837 = vmatpush.bf16.xpose.msra.mxu0 0
    %838 = vmatpush.bf16.xpose.msra.mxu0 0
    %839 = vmatpush.bf16.xpose.msra.mxu0 0
    %840 = vmatpush.bf16.xpose.msra.mxu0 0
    %841 = vmatpush.bf16.xpose.msra.mxu0 0
    %842 = vmatpush.bf16.xpose.msra.mxu0 0
    %843 = vmatpush.bf16.xpose.msra.mxu0 %v834
    %844 = vmatmul.bf16.gmra.mxu0 %v831
    %v845 = vpop.f32.mrf.mxu0
    %v846 = vadd.f32 %v262, %v845
    %v847 = vpop.f32.mrf.mxu0
    %848 = vdwg.mxu0
    %v850 = vunpack.c.l.b16 %v799
    %v851 = vpack.c.b16 %v850, %v850
    %852 = vrot.lane.b32.xlu0 %v851, 96
    %v853 = vpop.permute.xlu0 %852
    %v855 = vsel %vm274, %v799, 0
    %v858 = vsel %vm274, %v853, 0
    %860 = vmatpush.bf16.xpose.msra.mxu0 0
    %861 = vmatpush.bf16.xpose.msra.mxu0 0
    %862 = vmatpush.bf16.xpose.msra.mxu0 0
    %863 = vmatpush.bf16.xpose.msra.mxu0 0
    %864 = vmatpush.bf16.xpose.msra.mxu0 0
    %865 = vmatpush.bf16.xpose.msra.mxu0 0
    %866 = vmatpush.bf16.xpose.msra.mxu0 0
    %867 = vmatpush.bf16.xpose.msra.mxu0 %v858
    %868 = vmatmul.bf16.gmra.mxu0 %v855
    %v869 = vpop.f32.mrf.mxu0
    %v870 = vadd.f32 %v263, %v869
    %v871 = vpop.f32.mrf.mxu0
    %872 = vdwg.mxu0
    %v874 = vunpack.c.l.b16 %v800
    %v875 = vpack.c.b16 %v874, %v874
    %876 = vrot.lane.b32.xlu0 %v875, 96
    %v877 = vpop.permute.xlu0 %876
    %v879 = vsel %vm274, %v800, 0
    %v882 = vsel %vm274, %v877, 0
    %884 = vmatpush.bf16.xpose.msra.mxu0 0
    %885 = vmatpush.bf16.xpose.msra.mxu0 0
    %886 = vmatpush.bf16.xpose.msra.mxu0 0
    %887 = vmatpush.bf16.xpose.msra.mxu0 0
    %888 = vmatpush.bf16.xpose.msra.mxu0 0
    %889 = vmatpush.bf16.xpose.msra.mxu0 0
    %890 = vmatpush.bf16.xpose.msra.mxu0 0
    %891 = vmatpush.bf16.xpose.msra.mxu0 %v882
    %892 = vmatmul.bf16.gmra.mxu0 %v879
    %v893 = vpop.f32.mrf.mxu0
    %v894 = vadd.f32 %v264, %v893
    %v895 = vpop.f32.mrf.mxu0
    %896 = vdwg.mxu0
    %v897 = vsel %vm366, %v822, -inf
    %898 = vmax.xlane.f32.xlu0 %v897
    %v899 = vpop.xlane.xlu0 %898
    %v900 = vsel %vm366, %v846, -inf
    %901 = vmax.xlane.f32.xlu0 %v900
    %v902 = vpop.xlane.xlu0 %901
    %v903 = vsel %vm366, %v870, -inf
    %904 = vmax.xlane.f32.xlu0 %v903
    %v905 = vpop.xlane.xlu0 %904
    %v906 = vsel %vm366, %v894, -inf
    %907 = vmax.xlane.f32.xlu0 %v906
    %v908 = vpop.xlane.xlu0 %907
    %v909 = vsub.f32 %v822, %v899
    %v910 = vsub.f32 %v846, %v902
    %v911 = vsub.f32 %v870, %v905
    %v912 = vsub.f32 %v894, %v908
    %v913 = vmul.f32 %v909, 1.442695
    %v914 = vpow.pop %v913
    %v915 = vmul.f32 %v910, 1.442695
    %v916 = vpow.pop %v915
    %v917 = vmul.f32 %v911, 1.442695
    %v918 = vpow.pop %v917
    %v919 = vmul.f32 %v912, 1.442695
    %v920 = vpow.pop %v919
    %v921 = vsel %vm366, %v914, 0.0
    %922 = vadd.xlane.f32.xlu0 %v921
    %v923 = vpop.xlane.xlu0 %922
    %v924 = vsel %vm366, %v916, 0.0
    %925 = vadd.xlane.f32.xlu0 %v924
    %v926 = vpop.xlane.xlu0 %925
    %v927 = vsel %vm366, %v918, 0.0
    %928 = vadd.xlane.f32.xlu0 %v927
    %v929 = vpop.xlane.xlu0 %928
    %v930 = vsel %vm366, %v920, 0.0
    %931 = vadd.xlane.f32.xlu0 %v930
    %v932 = vpop.xlane.xlu0 %931
    %v933 = vrcp.pop %v923
    %v934 = vrcp.pop %v926
    %v935 = vrcp.pop %v929
    %v936 = vrcp.pop %v932
    %v937 = vmul.f32 %v914, %v933
    %v938 = vmul.f32 %v916, %v934
    %v939 = vmul.f32 %v918, %v935
    %v940 = vmul.f32 %v920, %v936
    %v941 = vpack.c.bf16 %v937, %v937
    %v942 = vpack.c.bf16 %v938, %v938
    %v943 = vpack.c.bf16 %v939, %v939
    %v944 = vpack.c.bf16 %v940, %v940
    %945 = vrot.lane.b32.xlu0 %v803, 64
    %v946 = vpop.permute.xlu0 %945
    %v948 = vsel %vm366, %v941, 0
    %v951 = vsel %vm116, %v946, 0
    %953 = vmatpush.bf16.msra.mxu0 0
    %954 = vmatpush.bf16.msra.mxu0 0
    %955 = vmatpush.bf16.msra.mxu0 0
    %956 = vmatpush.bf16.msra.mxu0 0
    %957 = vmatpush.bf16.msra.mxu0 0
    %958 = vmatpush.bf16.msra.mxu0 0
    %959 = vmatpush.bf16.msra.mxu0 0
    %960 = vmatpush.bf16.msra.mxu0 %v951
    %961 = vmatmul.bf16.gmra.mxu0 %v948
    %v962 = vpop.f32.mrf.mxu0
    %v963 = vadd.f32 0.0, %v962
    %v964 = vpop.f32.mrf.mxu0
    %965 = vdwg.mxu0
    %966 = vrot.lane.b32.xlu0 %v827, 64
    %v967 = vpop.permute.xlu0 %966
    %v969 = vsel %vm366, %v942, 0
    %v972 = vsel %vm116, %v967, 0
    %974 = vmatpush.bf16.msra.mxu0 0
    %975 = vmatpush.bf16.msra.mxu0 0
    %976 = vmatpush.bf16.msra.mxu0 0
    %977 = vmatpush.bf16.msra.mxu0 0
    %978 = vmatpush.bf16.msra.mxu0 0
    %979 = vmatpush.bf16.msra.mxu0 0
    %980 = vmatpush.bf16.msra.mxu0 0
    %981 = vmatpush.bf16.msra.mxu0 %v972
    %982 = vmatmul.bf16.gmra.mxu0 %v969
    %v983 = vpop.f32.mrf.mxu0
    %v984 = vadd.f32 0.0, %v983
    %v985 = vpop.f32.mrf.mxu0
    %986 = vdwg.mxu0
    %987 = vrot.lane.b32.xlu0 %v851, 64
    %v988 = vpop.permute.xlu0 %987
    %v990 = vsel %vm366, %v943, 0
    %v993 = vsel %vm116, %v988, 0
    %995 = vmatpush.bf16.msra.mxu0 0
    %996 = vmatpush.bf16.msra.mxu0 0
    %997 = vmatpush.bf16.msra.mxu0 0
    %998 = vmatpush.bf16.msra.mxu0 0
    %999 = vmatpush.bf16.msra.mxu0 0
    %1000 = vmatpush.bf16.msra.mxu0 0
    %1001 = vmatpush.bf16.msra.mxu0 0
    %1002 = vmatpush.bf16.msra.mxu0 %v993
    %1003 = vmatmul.bf16.gmra.mxu0 %v990
    %v1004 = vpop.f32.mrf.mxu0
    %v1005 = vadd.f32 0.0, %v1004
    %v1006 = vpop.f32.mrf.mxu0
    %1007 = vdwg.mxu0
    %1008 = vrot.lane.b32.xlu0 %v875, 64
    %v1009 = vpop.permute.xlu0 %1008
    %v1011 = vsel %vm366, %v944, 0
    %v1014 = vsel %vm116, %v1009, 0
    %1016 = vmatpush.bf16.msra.mxu0 0
    %1017 = vmatpush.bf16.msra.mxu0 0
    %1018 = vmatpush.bf16.msra.mxu0 0
    %1019 = vmatpush.bf16.msra.mxu0 0
    %1020 = vmatpush.bf16.msra.mxu0 0
    %1021 = vmatpush.bf16.msra.mxu0 0
    %1022 = vmatpush.bf16.msra.mxu0 0
    %1023 = vmatpush.bf16.msra.mxu0 %v1014
    %1024 = vmatmul.bf16.gmra.mxu0 %v1011
    %v1025 = vpop.f32.mrf.mxu0
    %v1026 = vadd.f32 0.0, %v1025
    %v1027 = vpop.f32.mrf.mxu0
    %1028 = vdwg.mxu0
    %1031 = vrot.lane.b32.xlu0 %v1005, 16
    %v1032 = vpop.permute.xlu0 %1031
    %1033 = vrot.lane.b32.xlu0 %v1026, 16
    %v1034 = vpop.permute.xlu0 %1033
    %v1037 = vsel %vm274, %v963, %v1032
    %v1038 = vsel %vm274, %v984, %v1034
    %s1039 = scalar_lea.vmem %s7, 16
    %v1040 = vld [vmem:[%s1039] sm:$0xf]
    %v1041 = vld [vmem:[%s1039 + $0x4] sm:$0xf]
    %v1042 = vld [vmem:[%s1039 + $0x8] sm:$0xf]
    %v1043 = vld [vmem:[%s1039 + $0xc] sm:$0xf]
    %v1044 = vpack.c.bf16 %v1038, %v1037
    %v1045 = vperm.slane %v79, 1
    %v1050 = vunpack.c.l.b16 %v1040
    %v1051 = vunpack.c.l.b16 %v1041
    %v1052 = vunpack.c.l.b16 %v1042
    %v1053 = vunpack.c.l.b16 %v1043
    %v1054 = vpack.c.b16 %v1051, %v1050
    %v1055 = vpack.c.b16 %v1053, %v1052
    %v1059 = vsel %vm143, %v1044, 0
    %1061 = vmatpush.bf16.msra.mxu0 0
    %1062 = vmatpush.bf16.msra.mxu0 0
    %1063 = vmatpush.bf16.msra.mxu0 0
    %1064 = vmatpush.bf16.msra.mxu0 0
    %1065 = vmatpush.bf16.msra.mxu0 0
    %1066 = vmatpush.bf16.msra.mxu0 0
    %1067 = vmatpush.bf16.msra.mxu0 %v1055
    %1068 = vmatpush.bf16.msra.mxu0 %v1054
    %1069 = vmatmul.bf16.gmra.mxu0 %v1059
    %v1070 = vpop.f32.mrf.mxu0
    %v1071 = vadd.f32 %v1045, %v1070
    %v1072 = vpop.f32.mrf.mxu0
    %v1073 = vadd.f32 %v1045, %v1072
    %1074 = vdwg.mxu0
    %v1075 = vadd.f32 %v751, %v1071
    %v1076 = vadd.f32 %v752, %v1073
    %v1077 = vsel %vm143, %v1075, 0.0
    %1078 = vadd.xlane.f32.xlu0 %v1077
    %v1079 = vpop.xlane.xlu0 %1078
    %v1080 = vsel %vm143, %v1076, 0.0
    %1081 = vadd.xlane.f32.xlu0 %v1080
    %v1082 = vpop.xlane.xlu0 %1081
    %v1083 = vmul.f32 %v1079, %v156
    %v1084 = vmul.f32 %v1082, %v156
    %v1085 = vsub.f32 %v1075, %v1083
    %v1086 = vsub.f32 %v1076, %v1084
    %v1087 = vmul.f32 %v1085, %v1085
    %v1088 = vmul.f32 %v1086, %v1086
    %v1089 = vsel %vm143, %v1087, 0.0
    %1090 = vadd.xlane.f32.xlu0 %v1089
    %v1091 = vpop.xlane.xlu0 %1090
    %v1092 = vsel %vm143, %v1088, 0.0
    %1093 = vadd.xlane.f32.xlu0 %v1092
    %v1094 = vpop.xlane.xlu0 %1093
    %v1095 = vmul.f32 %v1091, %v156
    %v1096 = vmul.f32 %v1094, %v156
    %v1097 = vadd.f32 %v1095, 1e-12
    %v1098 = vadd.f32 %v1096, 1e-12
    %v1099 = vrsqrt.pop %v1097
    %v1100 = vmul.f32 %v1099, %v1097
    %v1101 = vmul.f32 %v1100, %v1099
    %v1102 = vmul.f32 0.5, %v1101
    %v1103 = vsub.f32 1.5, %v1102
    %v1104 = vmul.f32 %v1099, %v1103
    %vm1105 = vweird.f32 %v1097
    %vm1106 = vweird.f32 %v1099
    %vm1107 = vmor %vm1105, %vm1106
    %v1108 = vsel %vm1107, %v1099, %v1104
    %v1109 = vrsqrt.pop %v1098
    %v1110 = vmul.f32 %v1109, %v1098
    %v1111 = vmul.f32 %v1110, %v1109
    %v1112 = vmul.f32 0.5, %v1111
    %v1113 = vsub.f32 1.5, %v1112
    %v1114 = vmul.f32 %v1109, %v1113
    %vm1115 = vweird.f32 %v1098
    %vm1116 = vweird.f32 %v1109
    %vm1117 = vmor %vm1115, %vm1116
    %v1118 = vsel %vm1117, %v1109, %v1114
    %v1119 = vmul.f32 %v1085, %v1108
    %v1120 = vmul.f32 %v1086, %v1118
    %v1121 = vperm.slane %v79, 2
    %v1122 = vmul.f32 %v1119, %v1121
    %v1123 = vmul.f32 %v1120, %v1121
    %v1124 = vperm.slane %v79, 3
    %v1125 = vadd.f32 %v1122, %v1124
    %v1126 = vadd.f32 %v1123, %v1124
    %s1127 = scalar_lea.vmem %s8, 16
    %v1128 = vld [vmem:[%s1127] sm:$0xf]
    %v1129 = vld [vmem:[%s1127 + $0x4] sm:$0xf]
    %v1130 = vld [vmem:[%s1127 + $0x8] sm:$0xf]
    %v1131 = vld [vmem:[%s1127 + $0xc] sm:$0xf]
    %v1132 = vpack.c.bf16 %v1126, %v1125
    %v1133 = vperm.slane %v79, 4
    %v1138 = vunpack.c.l.b16 %v1128
    %v1139 = vunpack.c.l.b16 %v1129
    %v1140 = vunpack.c.l.b16 %v1130
    %v1141 = vunpack.c.l.b16 %v1131
    %v1142 = vpack.c.b16 %v1139, %v1138
    %v1143 = vpack.c.b16 %v1141, %v1140
    %v1147 = vsel %vm143, %v1132, 0
    %1149 = vmatpush.bf16.msra.mxu0 0
    %1150 = vmatpush.bf16.msra.mxu0 0
    %1151 = vmatpush.bf16.msra.mxu0 0
    %1152 = vmatpush.bf16.msra.mxu0 0
    %1153 = vmatpush.bf16.msra.mxu0 0
    %1154 = vmatpush.bf16.msra.mxu0 0
    %1155 = vmatpush.bf16.msra.mxu0 %v1143
    %1156 = vmatpush.bf16.msra.mxu0 %v1142
    %1157 = vmatmul.bf16.gmra.mxu0 %v1147
    %v1158 = vpop.f32.mrf.mxu0
    %v1159 = vadd.f32 %v1133, %v1158
    %v1160 = vpop.f32.mrf.mxu0
    %v1161 = vadd.f32 %v1133, %v1160
    %1162 = vdwg.mxu0
    %v1163 = vmul.f32 %v1159, %v1159
    %v1164 = vmul.f32 %v1161, %v1161
    %v1165 = vmul.f32 %v1159, %v1163
    %v1166 = vmul.f32 %v1161, %v1164
    %v1167 = vmul.f32 %v1165, 0.044715
    %v1168 = vmul.f32 %v1166, 0.044715
    %v1169 = vadd.f32 %v1159, %v1167
    %v1170 = vadd.f32 %v1161, %v1168
    %v1171 = vmul.f32 %v1169, 0.7978846
    %v1172 = vmul.f32 %v1170, 0.7978846
    %v1173 = vtanh.pop %v1171
    %v1174 = vtanh.pop %v1172
    %v1175 = vadd.f32 %v1173, 1.0
    %v1176 = vadd.f32 %v1174, 1.0
    %v1177 = vmul.f32 %v1175, 0.5
    %v1178 = vmul.f32 %v1176, 0.5
    %v1179 = vmul.f32 %v1159, %v1177
    %v1180 = vmul.f32 %v1161, %v1178
    %s1181 = scalar_lea.vmem %s9, 32
    %v1182 = vld [vmem:[%s1181] sm:$0xf]
    %v1183 = vld [vmem:[%s1181 + $0x4] sm:$0xf]
    %v1184 = vld [vmem:[%s1181 + $0x8] sm:$0xf]
    %v1185 = vld [vmem:[%s1181 + $0xc] sm:$0xf]
    %v1186 = vld [vmem:[%s1181 + $0x10] sm:$0xf]
    %v1187 = vld [vmem:[%s1181 + $0x14] sm:$0xf]
    %v1188 = vld [vmem:[%s1181 + $0x18] sm:$0xf]
    %v1189 = vld [vmem:[%s1181 + $0x1c] sm:$0xf]
    %v1190 = vpack.c.bf16 %v1180, %v1179
    %v1191 = vperm.slane %v79, 5
    %v1200 = vunpack.c.l.b16 %v1182
    %v1201 = vunpack.c.l.b16 %v1183
    %v1202 = vunpack.c.l.b16 %v1184
    %v1203 = vunpack.c.l.b16 %v1185
    %v1204 = vunpack.c.l.b16 %v1186
    %v1205 = vunpack.c.l.b16 %v1187
    %v1206 = vunpack.c.l.b16 %v1188
    %v1207 = vunpack.c.l.b16 %v1189
    %v1208 = vpack.c.b16 %v1201, %v1200
    %v1209 = vpack.c.b16 %v1203, %v1202
    %v1210 = vpack.c.b16 %v1205, %v1204
    %v1211 = vpack.c.b16 %v1207, %v1206
    %v1217 = vsel %vm683, %v1190, 0
    %1219 = vmatpush.bf16.msra.mxu0 0
    %1220 = vmatpush.bf16.msra.mxu0 0
    %1221 = vmatpush.bf16.msra.mxu0 0
    %1222 = vmatpush.bf16.msra.mxu0 0
    %1223 = vmatpush.bf16.msra.mxu0 %v1211
    %1224 = vmatpush.bf16.msra.mxu0 %v1210
    %1225 = vmatpush.bf16.msra.mxu0 %v1209
    %1226 = vmatpush.bf16.msra.mxu0 %v1208
    %1227 = vmatmul.bf16.gmra.mxu0 %v1217
    %v1228 = vpop.f32.mrf.mxu0
    %v1229 = vadd.f32 %v1191, %v1228
    %v1230 = vpop.f32.mrf.mxu0
    %v1231 = vadd.f32 %v1191, %v1230
    %1232 = vdwg.mxu0
    %v1233 = vadd.f32 %v1125, %v1229
    %v1234 = vadd.f32 %v1126, %v1231
    %v1235 = vsel %vm143, %v1233, 0.0
    %1236 = vadd.xlane.f32.xlu0 %v1235
    %v1237 = vpop.xlane.xlu0 %1236
    %v1238 = vsel %vm143, %v1234, 0.0
    %1239 = vadd.xlane.f32.xlu0 %v1238
    %v1240 = vpop.xlane.xlu0 %1239
    %v1241 = vmul.f32 %v1237, %v156
    %v1242 = vmul.f32 %v1240, %v156
    %v1243 = vsub.f32 %v1233, %v1241
    %v1244 = vsub.f32 %v1234, %v1242
    %v1245 = vmul.f32 %v1243, %v1243
    %v1246 = vmul.f32 %v1244, %v1244
    %v1247 = vsel %vm143, %v1245, 0.0
    %1248 = vadd.xlane.f32.xlu0 %v1247
    %v1249 = vpop.xlane.xlu0 %1248
    %v1250 = vsel %vm143, %v1246, 0.0
    %1251 = vadd.xlane.f32.xlu0 %v1250
    %v1252 = vpop.xlane.xlu0 %1251
    %v1253 = vmul.f32 %v1249, %v156
    %v1254 = vmul.f32 %v1252, %v156
    %v1255 = vadd.f32 %v1253, 1e-12
    %v1256 = vadd.f32 %v1254, 1e-12
    %v1257 = vrsqrt.pop %v1255
    %v1258 = vmul.f32 %v1257, %v1255
    %v1259 = vmul.f32 %v1258, %v1257
    %v1260 = vmul.f32 0.5, %v1259
    %v1261 = vsub.f32 1.5, %v1260
    %v1262 = vmul.f32 %v1257, %v1261
    %vm1263 = vweird.f32 %v1255
    %vm1264 = vweird.f32 %v1257
    %vm1265 = vmor %vm1263, %vm1264
    %v1266 = vsel %vm1265, %v1257, %v1262
    %v1267 = vrsqrt.pop %v1256
    %v1268 = vmul.f32 %v1267, %v1256
    %v1269 = vmul.f32 %v1268, %v1267
    %v1270 = vmul.f32 0.5, %v1269
    %v1271 = vsub.f32 1.5, %v1270
    %v1272 = vmul.f32 %v1267, %v1271
    %vm1273 = vweird.f32 %v1256
    %vm1274 = vweird.f32 %v1267
    %vm1275 = vmor %vm1273, %vm1274
    %v1276 = vsel %vm1275, %v1267, %v1272
    %v1277 = vmul.f32 %v1243, %v1266
    %v1278 = vmul.f32 %v1244, %v1276
    %v1279 = vperm.slane %v79, 6
    %v1280 = vmul.f32 %v1277, %v1279
    %v1281 = vmul.f32 %v1278, %v1279
    %v1282 = vperm.slane %v79, 7
    %v1283 = vadd.f32 %v1280, %v1282
    %v1284 = vadd.f32 %v1281, %v1282
    %v1285 = vsel %vm143, %v1283, 0.0
    %v1286 = vrot.slane %v1285, 4
    %v1287 = vadd.f32 %v1285, %v1286
    %v1288 = vrot.slane %v1287, 2
    %v1289 = vadd.f32 %v1287, %v1288
    %v1290 = vrot.slane %v1289, 1
    %v1291 = vadd.f32 %v1289, %v1290
    %v1292 = vsel %vm143, %v1284, 0.0
    %v1293 = vrot.slane %v1292, 4
    %v1294 = vadd.f32 %v1292, %v1293
    %v1295 = vrot.slane %v1294, 2
    %v1296 = vadd.f32 %v1294, %v1295
    %v1297 = vrot.slane %v1296, 1
    %v1298 = vadd.f32 %v1296, %v1297
    %v1299 = vrcp.pop 8.0
    %v1300 = vmul.f32 8.0, %v1299
    %v1301 = vsub.f32 1.0, %v1300
    %v1302 = vmul.f32 %v1299, %v1301
    %v1303 = vadd.f32 %v1299, %v1302
    %vm1304 = vweird.f32 %v1299
    %v1305 = vsel %vm1304, %v1299, %v1303
    %v1306 = vmul.f32 %v1291, %v1305
    %v1307 = vmul.f32 %v1298, %v1305
    %v1308 = vld [vmem:[%s10] sm:$0xff]
    %v1309 = vld [vmem:[%s10 + $0x8] sm:$0xff]
    %v1310 = vld [vmem:[%s10 + $0x10] sm:$0xff]
    %v1311 = vld [vmem:[%s10 + $0x18] sm:$0xff]
    %v1312 = vld [vmem:[%s10 + $0x20] sm:$0xff]
    %v1313 = vld [vmem:[%s10 + $0x28] sm:$0xff]
    %v1314 = vld [vmem:[%s10 + $0x30] sm:$0xff]
    %v1315 = vld [vmem:[%s10 + $0x38] sm:$0xff]
    %v1316 = vpack.c.bf16 %v1306, %v1306
    %v1317 = vpack.c.bf16 %v1307, %v1307
    %v1318 = vperm.slane %v74, 0
    %v1319 = vperm.slane %v75, 0
    %v1320 = vperm.slane %v76, 0
    %v1321 = vperm.slane %v77, 0
    %v1324 = vunpack.c.l.b16 %v1316
    %v1325 = vunpack.c.l.b16 %v1317
    %vm1326 = vcmask 1041409
    %v1327 = vsel %vm1326, %v1325, %v1324
    %v1328 = vpack.c.b16 %v1327, %v1327
    %v1337 = vunpack.c.l.b16 %v1308
    %v1338 = vunpack.c.h.b16 %v1308
    %v1339 = vunpack.c.l.b16 %v1309
    %v1340 = vunpack.c.h.b16 %v1309
    %v1341 = vunpack.c.l.b16 %v1310
    %v1342 = vunpack.c.h.b16 %v1310
    %v1343 = vunpack.c.l.b16 %v1311
    %v1344 = vunpack.c.h.b16 %v1311
    %v1345 = vunpack.c.l.b16 %v1312
    %v1346 = vunpack.c.h.b16 %v1312
    %v1347 = vunpack.c.l.b16 %v1313
    %v1348 = vunpack.c.h.b16 %v1313
    %v1349 = vunpack.c.l.b16 %v1314
    %v1350 = vunpack.c.h.b16 %v1314
    %v1351 = vunpack.c.l.b16 %v1315
    %v1352 = vunpack.c.h.b16 %v1315
    %v1353 = vpack.c.b16 %v1341, %v1337
    %v1354 = vpack.c.b16 %v1342, %v1338
    %v1355 = vpack.c.b16 %v1343, %v1339
    %v1356 = vpack.c.b16 %v1344, %v1340
    %v1357 = vpack.c.b16 %v1349, %v1345
    %v1358 = vpack.c.b16 %v1350, %v1346
    %v1359 = vpack.c.b16 %v1351, %v1347
    %v1360 = vpack.c.b16 %v1352, %v1348
    %v1370 = vsel %vm143, %v1328, 0
    %1372 = vmatpush.bf16.msra.mxu0 0
    %1373 = vmatpush.bf16.msra.mxu0 0
    %1374 = vmatpush.bf16.msra.mxu0 0
    %1375 = vmatpush.bf16.msra.mxu0 0
    %1376 = vmatpush.bf16.msra.mxu0 0
    %1377 = vmatpush.bf16.msra.mxu0 0
    %1378 = vmatpush.bf16.msra.mxu0 %v1357
    %1379 = vmatpush.bf16.msra.mxu0 %v1353
    %1380 = vmatmul.bf16.gmra.mxu0 %v1370
    %v1381 = vpop.f32.mrf.mxu0
    %v1382 = vadd.f32 %v1318, %v1381
    %v1383 = vpop.f32.mrf.mxu0
    %1384 = vdwg.mxu0
    %1385 = vmatpush.bf16.msra.mxu0 0
    %1386 = vmatpush.bf16.msra.mxu0 0
    %1387 = vmatpush.bf16.msra.mxu0 0
    %1388 = vmatpush.bf16.msra.mxu0 0
    %1389 = vmatpush.bf16.msra.mxu0 0
    %1390 = vmatpush.bf16.msra.mxu0 0
    %1391 = vmatpush.bf16.msra.mxu0 %v1358
    %1392 = vmatpush.bf16.msra.mxu0 %v1354
    %1393 = vmatmul.bf16.gmra.mxu0 %v1370
    %v1394 = vpop.f32.mrf.mxu0
    %v1395 = vadd.f32 %v1319, %v1394
    %v1396 = vpop.f32.mrf.mxu0
    %1397 = vdwg.mxu0
    %1398 = vmatpush.bf16.msra.mxu0 0
    %1399 = vmatpush.bf16.msra.mxu0 0
    %1400 = vmatpush.bf16.msra.mxu0 0
    %1401 = vmatpush.bf16.msra.mxu0 0
    %1402 = vmatpush.bf16.msra.mxu0 0
    %1403 = vmatpush.bf16.msra.mxu0 0
    %1404 = vmatpush.bf16.msra.mxu0 %v1359
    %1405 = vmatpush.bf16.msra.mxu0 %v1355
    %1406 = vmatmul.bf16.gmra.mxu0 %v1370
    %v1407 = vpop.f32.mrf.mxu0
    %v1408 = vadd.f32 %v1320, %v1407
    %v1409 = vpop.f32.mrf.mxu0
    %1410 = vdwg.mxu0
    %1411 = vmatpush.bf16.msra.mxu0 0
    %1412 = vmatpush.bf16.msra.mxu0 0
    %1413 = vmatpush.bf16.msra.mxu0 0
    %1414 = vmatpush.bf16.msra.mxu0 0
    %1415 = vmatpush.bf16.msra.mxu0 0
    %1416 = vmatpush.bf16.msra.mxu0 0
    %1417 = vmatpush.bf16.msra.mxu0 %v1360
    %1418 = vmatpush.bf16.msra.mxu0 %v1356
    %1419 = vmatmul.bf16.gmra.mxu0 %v1370
    %v1420 = vpop.f32.mrf.mxu0
    %v1421 = vadd.f32 %v1321, %v1420
    %v1422 = vpop.f32.mrf.mxu0
    %1423 = vdwg.mxu0
    %v1424 = vmax.f32 %v1382, 0.0
    %v1425 = vmax.f32 %v1395, 0.0
    %v1426 = vmax.f32 %v1408, 0.0
    %v1427 = vmax.f32 %v1421, 0.0
    %v1428 = vld [vmem:[#allocation4] sm:$0xff]
    %v1429 = vld [vmem:[#allocation4 + $0x8] sm:$0xff]
    %v1430 = vld [vmem:[#allocation4 + $0x10] sm:$0xff]
    %v1431 = vld [vmem:[#allocation4 + $0x18] sm:$0xff]
    %v1432 = vld [vmem:[#allocation4 + $0x20] sm:$0xff]
    %v1433 = vld [vmem:[#allocation4 + $0x28] sm:$0xff]
    %v1434 = vld [vmem:[#allocation4 + $0x30] sm:$0xff]
    %v1435 = vld [vmem:[#allocation4 + $0x38] sm:$0xff]
    %v1436 = vld [vmem:[#allocation4 + $0x40] sm:$0xff]
    %v1437 = vld [vmem:[#allocation4 + $0x48] sm:$0xff]
    %v1438 = vld [vmem:[#allocation4 + $0x50] sm:$0xff]
    %v1439 = vld [vmem:[#allocation4 + $0x58] sm:$0xff]
    %v1440 = vld [vmem:[#allocation4 + $0x60] sm:$0xff]
    %v1441 = vld [vmem:[#allocation4 + $0x68] sm:$0xff]
    %v1442 = vld [vmem:[#allocation4 + $0x70] sm:$0xff]
    %v1443 = vld [vmem:[#allocation4 + $0x78] sm:$0xff]
    %v1444 = vld [vmem:[#allocation4 + $0x80] sm:$0xff]
    %v1445 = vld [vmem:[#allocation4 + $0x88] sm:$0xff]
    %v1446 = vld [vmem:[#allocation4 + $0x90] sm:$0xff]
    %v1447 = vld [vmem:[#allocation4 + $0x98] sm:$0xff]
    %v1448 = vld [vmem:[#allocation4 + $0xa0] sm:$0xff]
    %v1449 = vld [vmem:[#allocation4 + $0xa8] sm:$0xff]
    %v1450 = vld [vmem:[#allocation4 + $0xb0] sm:$0xff]
    %v1451 = vld [vmem:[#allocation4 + $0xb8] sm:$0xff]
    %v1452 = vld [vmem:[#allocation4 + $0xc0] sm:$0xff]
    %v1453 = vld [vmem:[#allocation4 + $0xc8] sm:$0xff]
    %v1454 = vld [vmem:[#allocation4 + $0xd0] sm:$0xff]
    %v1455 = vld [vmem:[#allocation4 + $0xd8] sm:$0xff]
    %v1456 = vld [vmem:[#allocation4 + $0xe0] sm:$0xff]
    %v1457 = vld [vmem:[#allocation4 + $0xe8] sm:$0xff]
    %v1458 = vld [vmem:[#allocation4 + $0xf0] sm:$0xff]
    %v1459 = vld [vmem:[#allocation4 + $0xf8] sm:$0xff]
    %v1460 = vld [vmem:[#allocation4 + $0x100] sm:$0xff]
    %v1461 = vld [vmem:[#allocation4 + $0x108] sm:$0xff]
    %v1462 = vld [vmem:[#allocation4 + $0x110] sm:$0xff]
    %v1463 = vld [vmem:[#allocation4 + $0x118] sm:$0xff]
    %v1464 = vld [vmem:[#allocation4 + $0x120] sm:$0xff]
    %v1465 = vld [vmem:[#allocation4 + $0x128] sm:$0xff]
    %v1466 = vld [vmem:[#allocation4 + $0x130] sm:$0xff]
    %v1467 = vld [vmem:[#allocation4 + $0x138] sm:$0xff]
    %v1468 = vld [vmem:[#allocation4 + $0x140] sm:$0xff]
    %v1469 = vld [vmem:[#allocation4 + $0x148] sm:$0xff]
    %v1470 = vld [vmem:[#allocation4 + $0x150] sm:$0xff]
    %v1471 = vld [vmem:[#allocation4 + $0x158] sm:$0xff]
    %v1472 = vld [vmem:[#allocation4 + $0x160] sm:$0xff]
    %v1473 = vld [vmem:[#allocation4 + $0x168] sm:$0xff]
    %v1474 = vld [vmem:[#allocation4 + $0x170] sm:$0xff]
    %v1475 = vld [vmem:[#allocation4 + $0x178] sm:$0xff]
    %v1476 = vld [vmem:[#allocation4 + $0x180] sm:$0xff]
    %v1477 = vld [vmem:[#allocation4 + $0x188] sm:$0xff]
    %v1478 = vld [vmem:[#allocation4 + $0x190] sm:$0xff]
    %v1479 = vld [vmem:[#allocation4 + $0x198] sm:$0xff]
    %v1480 = vld [vmem:[#allocation4 + $0x1a0] sm:$0xff]
    %v1481 = vld [vmem:[#allocation4 + $0x1a8] sm:$0xff]
    %v1482 = vld [vmem:[#allocation4 + $0x1b0] sm:$0xff]
    %v1483 = vld [vmem:[#allocation4 + $0x1b8] sm:$0xff]
    %v1484 = vld [vmem:[#allocation4 + $0x1c0] sm:$0xff]
    %v1485 = vld [vmem:[#allocation4 + $0x1c8] sm:$0xff]
    %v1486 = vld [vmem:[#allocation4 + $0x1d0] sm:$0xff]
    %v1487 = vld [vmem:[#allocation4 + $0x1d8] sm:$0xff]
    %v1488 = vld [vmem:[#allocation4 + $0x1e0] sm:$0xff]
    %v1489 = vld [vmem:[#allocation4 + $0x1e8] sm:$0xff]
    %v1490 = vld [vmem:[#allocation4 + $0x1f0] sm:$0xff]
    %v1491 = vld [vmem:[#allocation4 + $0x1f8] sm:$0xff]
    %v1492 = vpack.c.bf16 %v1424, %v1424
    %v1493 = vpack.c.bf16 %v1425, %v1425
    %v1494 = vpack.c.bf16 %v1426, %v1426
    %v1495 = vpack.c.bf16 %v1427, %v1427
    %v1496 = vperm.slane %v74, 1
    %v1497 = vperm.slane %v75, 1
    %v1562 = vunpack.c.l.b16 %v1428
    %v1563 = vunpack.c.h.b16 %v1428
    %v1564 = vunpack.c.l.b16 %v1429
    %v1565 = vunpack.c.h.b16 %v1429
    %v1566 = vunpack.c.l.b16 %v1430
    %v1567 = vunpack.c.h.b16 %v1430
    %v1568 = vunpack.c.l.b16 %v1431
    %v1569 = vunpack.c.h.b16 %v1431
    %v1570 = vunpack.c.l.b16 %v1432
    %v1571 = vunpack.c.h.b16 %v1432
    %v1572 = vunpack.c.l.b16 %v1433
    %v1573 = vunpack.c.h.b16 %v1433
    %v1574 = vunpack.c.l.b16 %v1434
    %v1575 = vunpack.c.h.b16 %v1434
    %v1576 = vunpack.c.l.b16 %v1435
    %v1577 = vunpack.c.h.b16 %v1435
    %v1578 = vunpack.c.l.b16 %v1436
    %v1579 = vunpack.c.h.b16 %v1436
    %v1580 = vunpack.c.l.b16 %v1437
    %v1581 = vunpack.c.h.b16 %v1437
    %v1582 = vunpack.c.l.b16 %v1438
    %v1583 = vunpack.c.h.b16 %v1438
    %v1584 = vunpack.c.l.b16 %v1439
    %v1585 = vunpack.c.h.b16 %v1439
    %v1586 = vunpack.c.l.b16 %v1440
    %v1587 = vunpack.c.h.b16 %v1440
    %v1588 = vunpack.c.l.b16 %v1441
    %v1589 = vunpack.c.h.b16 %v1441
    %v1590 = vunpack.c.l.b16 %v1442
    %v1591 = vunpack.c.h.b16 %v1442
    %v1592 = vunpack.c.l.b16 %v1443
    %v1593 = vunpack.c.h.b16 %v1443
    %v1594 = vunpack.c.l.b16 %v1444
    %v1595 = vunpack.c.h.b16 %v1444
    %v1596 = vunpack.c.l.b16 %v1445
    %v1597 = vunpack.c.h.b16 %v1445
    %v1598 = vunpack.c.l.b16 %v1446
    %v1599 = vunpack.c.h.b16 %v1446
    %v1600 = vunpack.c.l.b16 %v1447
    %v1601 = vunpack.c.h.b16 %v1447
    %v1602 = vunpack.c.l.b16 %v1448
    %v1603 = vunpack.c.h.b16 %v1448
    %v1604 = vunpack.c.l.b16 %v1449
    %v1605 = vunpack.c.h.b16 %v1449
    %v1606 = vunpack.c.l.b16 %v1450
    %v1607 = vunpack.c.h.b16 %v1450
    %v1608 = vunpack.c.l.b16 %v1451
    %v1609 = vunpack.c.h.b16 %v1451
    %v1610 = vunpack.c.l.b16 %v1452
    %v1611 = vunpack.c.h.b16 %v1452
    %v1612 = vunpack.c.l.b16 %v1453
    %v1613 = vunpack.c.h.b16 %v1453
    %v1614 = vunpack.c.l.b16 %v1454
    %v1615 = vunpack.c.h.b16 %v1454
    %v1616 = vunpack.c.l.b16 %v1455
    %v1617 = vunpack.c.h.b16 %v1455
    %v1618 = vunpack.c.l.b16 %v1456
    %v1619 = vunpack.c.h.b16 %v1456
    %v1620 = vunpack.c.l.b16 %v1457
    %v1621 = vunpack.c.h.b16 %v1457
    %v1622 = vunpack.c.l.b16 %v1458
    %v1623 = vunpack.c.h.b16 %v1458
    %v1624 = vunpack.c.l.b16 %v1459
    %v1625 = vunpack.c.h.b16 %v1459
    %v1626 = vunpack.c.l.b16 %v1460
    %v1627 = vunpack.c.h.b16 %v1460
    %v1628 = vunpack.c.l.b16 %v1461
    %v1629 = vunpack.c.h.b16 %v1461
    %v1630 = vunpack.c.l.b16 %v1462
    %v1631 = vunpack.c.h.b16 %v1462
    %v1632 = vunpack.c.l.b16 %v1463
    %v1633 = vunpack.c.h.b16 %v1463
    %v1634 = vunpack.c.l.b16 %v1464
    %v1635 = vunpack.c.h.b16 %v1464
    %v1636 = vunpack.c.l.b16 %v1465
    %v1637 = vunpack.c.h.b16 %v1465
    %v1638 = vunpack.c.l.b16 %v1466
    %v1639 = vunpack.c.h.b16 %v1466
    %v1640 = vunpack.c.l.b16 %v1467
    %v1641 = vunpack.c.h.b16 %v1467
    %v1642 = vunpack.c.l.b16 %v1468
    %v1643 = vunpack.c.h.b16 %v1468
    %v1644 = vunpack.c.l.b16 %v1469
    %v1645 = vunpack.c.h.b16 %v1469
    %v1646 = vunpack.c.l.b16 %v1470
    %v1647 = vunpack.c.h.b16 %v1470
    %v1648 = vunpack.c.l.b16 %v1471
    %v1649 = vunpack.c.h.b16 %v1471
    %v1650 = vunpack.c.l.b16 %v1472
    %v1651 = vunpack.c.h.b16 %v1472
    %v1652 = vunpack.c.l.b16 %v1473
    %v1653 = vunpack.c.h.b16 %v1473
    %v1654 = vunpack.c.l.b16 %v1474
    %v1655 = vunpack.c.h.b16 %v1474
    %v1656 = vunpack.c.l.b16 %v1475
    %v1657 = vunpack.c.h.b16 %v1475
    %v1658 = vunpack.c.l.b16 %v1476
    %v1659 = vunpack.c.h.b16 %v1476
    %v1660 = vunpack.c.l.b16 %v1477
    %v1661 = vunpack.c.h.b16 %v1477
    %v1662 = vunpack.c.l.b16 %v1478
    %v1663 = vunpack.c.h.b16 %v1478
    %v1664 = vunpack.c.l.b16 %v1479
    %v1665 = vunpack.c.h.b16 %v1479
    %v1666 = vunpack.c.l.b16 %v1480
    %v1667 = vunpack.c.h.b16 %v1480
    %v1668 = vunpack.c.l.b16 %v1481
    %v1669 = vunpack.c.h.b16 %v1481
    %v1670 = vunpack.c.l.b16 %v1482
    %v1671 = vunpack.c.h.b16 %v1482
    %v1672 = vunpack.c.l.b16 %v1483
    %v1673 = vunpack.c.h.b16 %v1483
    %v1674 = vunpack.c.l.b16 %v1484
    %v1675 = vunpack.c.h.b16 %v1484
    %v1676 = vunpack.c.l.b16 %v1485
    %v1677 = vunpack.c.h.b16 %v1485
    %v1678 = vunpack.c.l.b16 %v1486
    %v1679 = vunpack.c.h.b16 %v1486
    %v1680 = vunpack.c.l.b16 %v1487
    %v1681 = vunpack.c.h.b16 %v1487
    %v1682 = vunpack.c.l.b16 %v1488
    %v1683 = vunpack.c.h.b16 %v1488
    %v1684 = vunpack.c.l.b16 %v1489
    %v1685 = vunpack.c.h.b16 %v1489
    %v1686 = vunpack.c.l.b16 %v1490
    %v1687 = vunpack.c.h.b16 %v1490
    %v1688 = vunpack.c.l.b16 %v1491
    %v1689 = vunpack.c.h.b16 %v1491
    %v1690 = vpack.c.b16 %v1564, %v1562
    %v1691 = vpack.c.b16 %v1565, %v1563
    %v1692 = vpack.c.b16 %v1568, %v1566
    %v1693 = vpack.c.b16 %v1569, %v1567
    %v1694 = vpack.c.b16 %v1572, %v1570
    %v1695 = vpack.c.b16 %v1573, %v1571
    %v1696 = vpack.c.b16 %v1576, %v1574
    %v1697 = vpack.c.b16 %v1577, %v1575
    %v1698 = vpack.c.b16 %v1580, %v1578
    %v1699 = vpack.c.b16 %v1581, %v1579
    %v1700 = vpack.c.b16 %v1584, %v1582
    %v1701 = vpack.c.b16 %v1585, %v1583
    %v1702 = vpack.c.b16 %v1588, %v1586
    %v1703 = vpack.c.b16 %v1589, %v1587
    %v1704 = vpack.c.b16 %v1592, %v1590
    %v1705 = vpack.c.b16 %v1593, %v1591
    %v1706 = vpack.c.b16 %v1596, %v1594
    %v1707 = vpack.c.b16 %v1597, %v1595
    %v1708 = vpack.c.b16 %v1600, %v1598
    %v1709 = vpack.c.b16 %v1601, %v1599
    %v1710 = vpack.c.b16 %v1604, %v1602
    %v1711 = vpack.c.b16 %v1605, %v1603
    %v1712 = vpack.c.b16 %v1608, %v1606
    %v1713 = vpack.c.b16 %v1609, %v1607
    %v1714 = vpack.c.b16 %v1612, %v1610
    %v1715 = vpack.c.b16 %v1613, %v1611
    %v1716 = vpack.c.b16 %v1616, %v1614
    %v1717 = vpack.c.b16 %v1617, %v1615
    %v1718 = vpack.c.b16 %v1620, %v1618
    %v1719 = vpack.c.b16 %v1621, %v1619
    %v1720 = vpack.c.b16 %v1624, %v1622
    %v1721 = vpack.c.b16 %v1625, %v1623
    %v1722 = vpack.c.b16 %v1628, %v1626
    %v1723 = vpack.c.b16 %v1629, %v1627
    %v1724 = vpack.c.b16 %v1632, %v1630
    %v1725 = vpack.c.b16 %v1633, %v1631
    %v1726 = vpack.c.b16 %v1636, %v1634
    %v1727 = vpack.c.b16 %v1637, %v1635
    %v1728 = vpack.c.b16 %v1640, %v1638
    %v1729 = vpack.c.b16 %v1641, %v1639
    %v1730 = vpack.c.b16 %v1644, %v1642
    %v1731 = vpack.c.b16 %v1645, %v1643
    %v1732 = vpack.c.b16 %v1648, %v1646
    %v1733 = vpack.c.b16 %v1649, %v1647
    %v1734 = vpack.c.b16 %v1652, %v1650
    %v1735 = vpack.c.b16 %v1653, %v1651
    %v1736 = vpack.c.b16 %v1656, %v1654
    %v1737 = vpack.c.b16 %v1657, %v1655
    %v1738 = vpack.c.b16 %v1660, %v1658
    %v1739 = vpack.c.b16 %v1661, %v1659
    %v1740 = vpack.c.b16 %v1664, %v1662
    %v1741 = vpack.c.b16 %v1665, %v1663
    %v1742 = vpack.c.b16 %v1668, %v1666
    %v1743 = vpack.c.b16 %v1669, %v1667
    %v1744 = vpack.c.b16 %v1672, %v1670
    %v1745 = vpack.c.b16 %v1673, %v1671
    %v1746 = vpack.c.b16 %v1676, %v1674
    %v1747 = vpack.c.b16 %v1677, %v1675
    %v1748 = vpack.c.b16 %v1680, %v1678
    %v1749 = vpack.c.b16 %v1681, %v1679
    %v1750 = vpack.c.b16 %v1684, %v1682
    %v1751 = vpack.c.b16 %v1685, %v1683
    %v1752 = vpack.c.b16 %v1688, %v1686
    %v1753 = vpack.c.b16 %v1689, %v1687
    %1818 = vmatpush.bf16.msra.mxu0 %v1704
    %1819 = vmatpush.bf16.msra.mxu0 %v1702
    %1820 = vmatpush.bf16.msra.mxu0 %v1700
    %1821 = vmatpush.bf16.msra.mxu0 %v1698
    %1822 = vmatpush.bf16.msra.mxu0 %v1696
    %1823 = vmatpush.bf16.msra.mxu0 %v1694
    %1824 = vmatpush.bf16.msra.mxu0 %v1692
    %1825 = vmatpush.bf16.msra.mxu0 %v1690
    %1826 = vmatmul.bf16.gmra.mxu0 %v1492
    %v1827 = vpop.f32.mrf.mxu0
    %v1828 = vadd.f32 %v1496, %v1827
    %v1829 = vpop.f32.mrf.mxu0
    %1830 = vdwg.mxu0
    %1831 = vmatpush.bf16.msra.mxu0 %v1720
    %1832 = vmatpush.bf16.msra.mxu0 %v1718
    %1833 = vmatpush.bf16.msra.mxu0 %v1716
    %1834 = vmatpush.bf16.msra.mxu0 %v1714
    %1835 = vmatpush.bf16.msra.mxu0 %v1712
    %1836 = vmatpush.bf16.msra.mxu0 %v1710
    %1837 = vmatpush.bf16.msra.mxu0 %v1708
    %1838 = vmatpush.bf16.msra.mxu0 %v1706
    %1839 = vmatmul.bf16.gmra.mxu0 %v1493
    %v1840 = vpop.f32.mrf.mxu0
    %v1841 = vadd.f32 %v1828, %v1840
    %v1842 = vpop.f32.mrf.mxu0
    %1843 = vdwg.mxu0
    %1844 = vmatpush.bf16.msra.mxu0 %v1736
    %1845 = vmatpush.bf16.msra.mxu0 %v1734
    %1846 = vmatpush.bf16.msra.mxu0 %v1732
    %1847 = vmatpush.bf16.msra.mxu0 %v1730
    %1848 = vmatpush.bf16.msra.mxu0 %v1728
    %1849 = vmatpush.bf16.msra.mxu0 %v1726
    %1850 = vmatpush.bf16.msra.mxu0 %v1724
    %1851 = vmatpush.bf16.msra.mxu0 %v1722
    %1852 = vmatmul.bf16.gmra.mxu0 %v1494
    %v1853 = vpop.f32.mrf.mxu0
    %v1854 = vadd.f32 %v1841, %v1853
    %v1855 = vpop.f32.mrf.mxu0
    %1856 = vdwg.mxu0
    %1857 = vmatpush.bf16.msra.mxu0 %v1752
    %1858 = vmatpush.bf16.msra.mxu0 %v1750
    %1859 = vmatpush.bf16.msra.mxu0 %v1748
    %1860 = vmatpush.bf16.msra.mxu0 %v1746
    %1861 = vmatpush.bf16.msra.mxu0 %v1744
    %1862 = vmatpush.bf16.msra.mxu0 %v1742
    %1863 = vmatpush.bf16.msra.mxu0 %v1740
    %1864 = vmatpush.bf16.msra.mxu0 %v1738
    %1865 = vmatmul.bf16.gmra.mxu0 %v1495
    %v1866 = vpop.f32.mrf.mxu0
    %v1867 = vadd.f32 %v1854, %v1866
    %v1868 = vpop.f32.mrf.mxu0
    %1869 = vdwg.mxu0
    %1870 = vmatpush.bf16.msra.mxu0 %v1705
    %1871 = vmatpush.bf16.msra.mxu0 %v1703
    %1872 = vmatpush.bf16.msra.mxu0 %v1701
    %1873 = vmatpush.bf16.msra.mxu0 %v1699
    %1874 = vmatpush.bf16.msra.mxu0 %v1697
    %1875 = vmatpush.bf16.msra.mxu0 %v1695
    %1876 = vmatpush.bf16.msra.mxu0 %v1693
    %1877 = vmatpush.bf16.msra.mxu0 %v1691
    %1878 = vmatmul.bf16.gmra.mxu0 %v1492
    %v1879 = vpop.f32.mrf.mxu0
    %v1880 = vadd.f32 %v1497, %v1879
    %v1881 = vpop.f32.mrf.mxu0
    %1882 = vdwg.mxu0
    %1883 = vmatpush.bf16.msra.mxu0 %v1721
    %1884 = vmatpush.bf16.msra.mxu0 %v1719
    %1885 = vmatpush.bf16.msra.mxu0 %v1717
    %1886 = vmatpush.bf16.msra.mxu0 %v1715
    %1887 = vmatpush.bf16.msra.mxu0 %v1713
    %1888 = vmatpush.bf16.msra.mxu0 %v1711
    %1889 = vmatpush.bf16.msra.mxu0 %v1709
    %1890 = vmatpush.bf16.msra.mxu0 %v1707
    %1891 = vmatmul.bf16.gmra.mxu0 %v1493
    %v1892 = vpop.f32.mrf.mxu0
    %v1893 = vadd.f32 %v1880, %v1892
    %v1894 = vpop.f32.mrf.mxu0
    %1895 = vdwg.mxu0
    %1896 = vmatpush.bf16.msra.mxu0 %v1737
    %1897 = vmatpush.bf16.msra.mxu0 %v1735
    %1898 = vmatpush.bf16.msra.mxu0 %v1733
    %1899 = vmatpush.bf16.msra.mxu0 %v1731
    %1900 = vmatpush.bf16.msra.mxu0 %v1729
    %1901 = vmatpush.bf16.msra.mxu0 %v1727
    %1902 = vmatpush.bf16.msra.mxu0 %v1725
    %1903 = vmatpush.bf16.msra.mxu0 %v1723
    %1904 = vmatmul.bf16.gmra.mxu0 %v1494
    %v1905 = vpop.f32.mrf.mxu0
    %v1906 = vadd.f32 %v1893, %v1905
    %v1907 = vpop.f32.mrf.mxu0
    %1908 = vdwg.mxu0
    %1909 = vmatpush.bf16.msra.mxu0 %v1753
    %1910 = vmatpush.bf16.msra.mxu0 %v1751
    %1911 = vmatpush.bf16.msra.mxu0 %v1749
    %1912 = vmatpush.bf16.msra.mxu0 %v1747
    %1913 = vmatpush.bf16.msra.mxu0 %v1745
    %1914 = vmatpush.bf16.msra.mxu0 %v1743
    %1915 = vmatpush.bf16.msra.mxu0 %v1741
    %1916 = vmatpush.bf16.msra.mxu0 %v1739
    %1917 = vmatmul.bf16.gmra.mxu0 %v1495
    %v1918 = vpop.f32.mrf.mxu0
    %v1919 = vadd.f32 %v1906, %v1918
    %v1920 = vpop.f32.mrf.mxu0
    %1921 = vdwg.mxu0
    %v1922 = vmax.f32 %v1867, 0.0
    %v1923 = vmax.f32 %v1919, 0.0
    %v1924 = vperm.slane %v74, 2
    %v1925 = vperm.slane %v75, 2
    %v1926 = vmul.f32 %v1922, %v1924
    %v1927 = vmul.f32 %v1923, %v1925
    %v1928 = vsel %vm208, %v1926, 0.0
    %v1929 = vsel %vm208, %v1927, 0.0
    %v1930 = vadd.f32 %v1928, %v1929
    %1931 = vadd.xlane.f32.xlu0 %v1930
    %v1932 = vpop.xlane.xlu0 %1931
    %v1933 = vperm.slane %v74, 3
    %v1934 = vadd.f32 %v1932, %v1933
    %vm1935 = vcmask 1024
    %1936 = vst.msk [vmem:[%s12] sm:$0x3] %vm1935, %v1934
    // Predicated region
    $region58: #{forward.1} parent=1 // pred_check
      _
    $region59: #{forward.1} parent=1 // pred_check_branch
      %1938 = sbr.rel (0) target = $region61
    $region60: #{forward.1} parent=1 // pred_region
      _
    $region61: #{forward.1} parent=1 // pred_fallthru
      _
    // Predicated region
    $region62: #{forward.1} parent=1 // pred_check
      _
    $region63: #{forward.1} parent=1 // pred_check_branch
      %1940 = sbr.rel (0) target = $region65
    $region64: #{forward.1} parent=1 // pred_region
      _
    $region65: #{forward.1} parent=1 // pred_fallthru
      _
    %1941 = vsyncpa [#allocation3], 1
    %1942 = vsyncpa [#allocation5], 1

</llo_original>
